<compile_context>
chip_gen: v7x
topology: tpu7x:2x2x1
jax: 0.10.0
libtpu: 0.0.40
codegen_flags: <defaults>
</compile_context>

<pallas_src>
import functools

import jax
import jax.numpy as jnp
from jax import lax
from jax.experimental import pallas as pl
from jax.experimental.pallas import tpu as pltpu


# ----------------------------------------------------------------------------
# Small helpers.
# ----------------------------------------------------------------------------
def _round_up(v, m):
    return ((v + m - 1) // m) * m


def _pick_query_tile(hw, max_tq):
    """Lane-aligned (multiple of 128) query tile, capped at max_tq."""
    cap = max(128, (max_tq // 128) * 128)
    return min(_round_up(hw, 128), cap)


# ----------------------------------------------------------------------------
# Kernel: full object attention for one (batch, query-tile) block.
#
# Layouts (channels in sublanes, tokens in lanes):
#   x     : (Cp, TQ)     padded pixel tokens
#   ptok  : (Mp, Cp)     proxy tokens, token-rows  (for key^T)
#   pchan : (Cp, Mp)     proxy tokens, channel-rows (for value)
# Every jnp.dot below is a standard A@B contraction (no transpose flags).
# ----------------------------------------------------------------------------
def _object_attention_kernel(m_valid,
                             x_ref, ptok_ref, pchan_ref,
                             wp1_ref, bp1_ref, wp2_ref, bp2_ref,    # f_pixel
                             wo1t_ref, bo1_ref, wo2t_ref, bo2_ref,  # f_object
                             wd_ref, bd_ref,                        # f_down
                             wu_ref, bu_ref,                        # f_up
                             o_ref):
    f32, bf16 = jnp.float32, jnp.bfloat16
    x = x_ref[0]            # (Cp, TQ) bf16
    ptok = ptok_ref[0]      # (Mp, Cp) bf16
    pchan = pchan_ref[0]    # (Cp, Mp) bf16

    # f_pixel: query (Kp, TQ).  key_channels**-0.5 is folded into wp2/bp2.
    h = jnp.dot(wp1_ref[...], x, preferred_element_type=f32)
    h = jnp.maximum(h + bp1_ref[...], 0.0)
    q = jnp.dot(wp2_ref[...], h.astype(bf16), preferred_element_type=f32)
    q = jnp.maximum(q + bp2_ref[...], 0.0)                           # (Kp, TQ)

    # f_object: key^T (Mp, Kp) -- recomputed per tile (tiny, megacore-safe).
    hk = jnp.dot(ptok, wo1t_ref[...], preferred_element_type=f32)
    hk = jnp.maximum(hk + bo1_ref[...], 0.0)
    kT = jnp.dot(hk.astype(bf16), wo2t_ref[...], preferred_element_type=f32)
    kT = jnp.maximum(kT + bo2_ref[...], 0.0)                         # (Mp, Kp)

    # f_down: value (Kp, Mp).
    v = jnp.dot(wd_ref[...], pchan, preferred_element_type=f32)
    v = jnp.maximum(v + bd_ref[...], 0.0)                            # (Kp, Mp)

    # sim (Mp, TQ); softmax over the (sublane) proxy-token axis.
    # Padded proxy tokens carry ReLU(bias) != 0 keys -> mask logits to -inf.
    sim = jnp.dot(kT.astype(bf16), q.astype(bf16), preferred_element_type=f32)
    row = lax.broadcasted_iota(jnp.int32, sim.shape, 0)
    sim = jnp.where(row < m_valid, sim, jnp.float32(-1e30))
    sim = sim - jnp.max(sim, axis=0, keepdims=True)
    e = jnp.exp(sim)
    p = e * pl.reciprocal(jnp.sum(e, axis=0, keepdims=True), approx=True)

    # context (Kp, TQ), then f_up -> (Cp, TQ); store bf16 (lane-dense vst).
    ctx = jnp.dot(v.astype(bf16), p.astype(bf16), preferred_element_type=f32)
    out = jnp.dot(wu_ref[...], ctx.astype(bf16), preferred_element_type=f32)
    out = jnp.maximum(out + bu_ref[...], 0.0)
    o_ref[0] = out.astype(o_ref.dtype)


# ----------------------------------------------------------------------------
# Parameter construction + BN folding (deterministic, synthetic).
# ----------------------------------------------------------------------------
def _fold_conv_bn(conv_w, gamma, beta, mean, var, eps=1e-5):
    """conv_w: (C_out, C_in). Returns folded (W_eff: (C_out, C_in), b_eff: (C_out,))."""
    s = gamma / jnp.sqrt(var + eps)
    return (s[:, None] * conv_w).astype(jnp.float32), (beta - s * mean).astype(jnp.float32)


def make_params(key, in_channels, key_channels):
    """Deterministic synthetic weights matching the module's __init__ shapes."""
    def conv_bn(k, c_in, c_out):
        k1, k2, k3, k4, k5 = jax.random.split(k, 5)
        w = jax.random.normal(k1, (c_out, c_in), jnp.float32) * 0.2
        gamma = 1.0 + 0.1 * jax.random.normal(k2, (c_out,), jnp.float32)
        beta = 0.1 * jax.random.normal(k3, (c_out,), jnp.float32)
        mean = 0.05 * jax.random.normal(k4, (c_out,), jnp.float32)
        var = 1.0 + 0.1 * jax.random.uniform(k5, (c_out,), jnp.float32)
        return _fold_conv_bn(w, gamma, beta, mean, var)

    keys = jax.random.split(key, 6)
    C, K = in_channels, key_channels
    return {
        "p1": conv_bn(keys[0], C, K),   # f_pixel[0]
        "p2": conv_bn(keys[1], K, K),   # f_pixel[1]
        "o1": conv_bn(keys[2], C, K),   # f_object[0]
        "o2": conv_bn(keys[3], K, K),   # f_object[1]
        "d":  conv_bn(keys[4], C, K),   # f_down
        "u":  conv_bn(keys[5], K, C),   # f_up
    }


def _prep_params(params, key_channels, Cp, Kp):
    """Pad, orient for the channel-rows layout, fold the attention scale into
    f_pixel[1], and cast matmul operands to bf16 (biases stay f32)."""
    s = jnp.float32(key_channels) ** -0.5

    def padw(a, rows, cols):
        a = jnp.asarray(a, jnp.float32)
        return jnp.pad(a, ((0, rows - a.shape[0]), (0, cols - a.shape[1]))).astype(jnp.bfloat16)

    def col(b, rows):   # (rows, 1) f32 -- broadcast along lanes
        return jnp.pad(jnp.asarray(b, jnp.float32), (0, rows - b.shape[0]))[:, None]

    def row(b, cols):   # (1, cols) f32 -- broadcast along sublanes
        return jnp.pad(jnp.asarray(b, jnp.float32), (0, cols - b.shape[0]))[None, :]

    wp1, bp1 = params["p1"]; wp2, bp2 = params["p2"]
    wo1, bo1 = params["o1"]; wo2, bo2 = params["o2"]
    wd, bd = params["d"];    wu, bu = params["u"]
    return (
        padw(wp1, Kp, Cp),     col(bp1, Kp),        # f_pixel[0]
        padw(wp2 * s, Kp, Kp), col(bp2 * s, Kp),    # f_pixel[1]  (scale folded in)
        padw(wo1.T, Cp, Kp),   row(bo1, Kp),        # f_object[0] (transposed: token-rows)
        padw(wo2.T, Kp, Kp),   row(bo2, Kp),        # f_object[1] (transposed)
        padw(wd, Kp, Cp),      col(bd, Kp),         # f_down
        padw(wu, Cp, Kp),      col(bu, Cp),         # f_up
    )


# ----------------------------------------------------------------------------
# Wrapper: padding glue (no big transposes) + the pallas_call.
# ----------------------------------------------------------------------------
def object_attention_block(x, proxy, params, key_channels, scale=1, max_tq=1024):
    """Forward pass of _ObjectAttentionBlock (scale=1).  Returns bf16 NCHW.

    max_tq: query-token tile (multiple of 128).  1024 is budgeted for v7x's
    64 MiB VMEM; raise to 2048-4096 on v5e/v6e (128 MiB VMEM).
    """
    # TODO(synk): scale>1 (MaxPool2d downsample + bilinear upsample) not
    #             implemented in-kernel; this path matches the module for scale=1.
    assert scale == 1
    N, C, H, W = x.shape
    Np, Cin_p, Hp_, Wp_ = proxy.shape
    assert N == Np and C == Cin_p
    HW, M = H * W, Hp_ * Wp_

    Cp = _round_up(C, 16)              # channel dim -> sublane multiple (bf16 packs 16)
    Kp = _round_up(key_channels, 16)   # key dim     -> sublane multiple
    Mp = _round_up(M, 16)              # proxy tokens -> sublane multiple (masked in-kernel)
    TQ = _pick_query_tile(HW, max_tq)  # query tokens -> lane multiple (128)
    HWp = _round_up(HW, TQ)
    n_tiles = HWp // TQ

    # x: NCHW -> (N, Cp, HWp) channel-rows: reshape + zero pad + cast only.
    x_cr = jnp.pad(x.reshape(N, C, HW),
                   ((0, 0), (0, Cp - C), (0, HWp - HW))).astype(jnp.bfloat16)
    # proxy is tiny: pass both orientations so key/value need no in-kernel transpose.
    p_flat = proxy.reshape(N, C, M)
    p_chan = jnp.pad(p_flat, ((0, 0), (0, Cp - C), (0, Mp - M))).astype(jnp.bfloat16)
    p_tok = jnp.pad(p_flat.transpose(0, 2, 1),
                    ((0, 0), (0, Mp - M), (0, Cp - C))).astype(jnp.bfloat16)

    weights = _prep_params(params, key_channels, Cp, Kp)

    const2 = lambda b, t: (0, 0)       # weights: same block every grid step
    in_specs = [
        pl.BlockSpec((1, Cp, TQ), lambda b, t: (b, 0, t)),   # x tile
        pl.BlockSpec((1, Mp, Cp), lambda b, t: (b, 0, 0)),   # proxy (token-rows)
        pl.BlockSpec((1, Cp, Mp), lambda b, t: (b, 0, 0)),   # proxy (channel-rows)
    ] + [pl.BlockSpec(wa.shape, const2) for wa in weights]

    # Advisory cost estimate for XLA's scheduler.
    per_tile_flops = (2 * TQ * (Cp * Kp + Kp * Kp + 2 * Mp * Kp + Kp * Cp)
                      + 2 * Mp * Kp * (Cp + Kp) + 2 * Kp * Cp * Mp)
    weight_bytes = sum(int(a.size) * a.dtype.itemsize for a in weights)
    cost = pl.CostEstimate(
        flops=int(N * n_tiles * per_tile_flops),
        transcendentals=int(N * n_tiles * Mp * TQ),
        bytes_accessed=int(2 * N * Cp * HWp * 2
                           + N * n_tiles * (2 * Cp * Mp * 2 + weight_bytes)))

    out_cr = pl.pallas_call(
        functools.partial(_object_attention_kernel, M),
        out_shape=jax.ShapeDtypeStruct((N, Cp, HWp), jnp.bfloat16),
        grid=(N, n_tiles),
        in_specs=in_specs,
        out_specs=pl.BlockSpec((1, Cp, TQ), lambda b, t: (b, 0, t)),
        compiler_params=pltpu.CompilerParams(
            dimension_semantics=("parallel", "parallel"),
            vmem_limit_bytes=64 * 1024 * 1024),
        cost_estimate=cost,
    )(x_cr, p_tok, p_chan, *weights)

    # Drop channel / token padding; slice + reshape only (no transpose).
    return out_cr[:, :C, :HW].reshape(N, C, H, W)


# ----------------------------------------------------------------------------
# Pure-JAX f32 reference (exact module math) for a sanity check.
# ----------------------------------------------------------------------------
def reference(x, proxy, params, key_channels):
    N, C, H, W = x.shape
    _, _, Hp_, Wp_ = proxy.shape
    HW, M = H * W, Hp_ * Wp_
    x_t = x.reshape(N, C, HW).transpose(0, 2, 1)
    p_t = proxy.reshape(N, C, M).transpose(0, 2, 1)

    def cbr(t, wb):
        w, b = wb
        return jnp.maximum(jnp.einsum("ntc,kc->ntk", t, w) + b, 0.0)

    q = cbr(cbr(x_t, params["p1"]), params["p2"])
    k = cbr(cbr(p_t, params["o1"]), params["o2"])
    v = cbr(p_t, params["d"])
    sim = jnp.einsum("nqc,nmc->nqm", q, k) * (key_channels ** -0.5)
    sim = jax.nn.softmax(sim, axis=-1)
    ctx = jnp.einsum("nqm,nmc->nqc", sim, v)
    out = cbr(ctx, params["u"])
    return out.transpose(0, 2, 1).reshape(N, C, H, W)


if __name__ == "__main__":
    def check(N, C, K, H, W, Hp_, Wp_, max_tq):
        root = jax.random.PRNGKey(0)
        kx, kp, kw = jax.random.split(root, 3)
        x = jax.random.normal(kx, (N, C, H, W), jnp.float32)
        proxy = jax.random.normal(kp, (N, C, Hp_, Wp_), jnp.float32)
        params = make_params(kw, C, K)
        out = object_attention_block(x, proxy, params, K, max_tq=max_tq)
        out = jax.block_until_ready(out)
        ref = reference(x, proxy, params, K)
        assert out.shape == (N, C, H, W)
        # bf16 operands + bf16 output + approx softmax reciprocal -> loose tol.
        assert jnp.allclose(out.astype(jnp.float32), ref, atol=5e-2, rtol=5e-2), \
            "mismatch vs reference"

    # Primary config: N=2, C=4, K=8, 16x16 input, 8 proxy regions.
    # max_tq=128 so HW=256 exercises the multi-tile (2-tile) path.
    check(2, 4, 8, 16, 16, 8, 1, 128)
    # Ragged config: HW=63 (padded to 128) and M=5 (padded + masked to 16).
    check(2, 4, 8, 7, 9, 5, 1, 128)

    print("KERNEL_OK")
</pallas_src>

<mosaic_0001>
module attributes {stable_mosaic.version = 11 : i64} {
  func.func @_object_attention_kernel(%arg0: i32, %arg1: i32, %arg2: memref<1x16x128xbf16, #tpu.memory_space<vmem>>, %arg3: memref<1x16x16xbf16, #tpu.memory_space<vmem>>, %arg4: memref<1x16x16xbf16, #tpu.memory_space<vmem>>, %arg5: memref<16x16xbf16, #tpu.memory_space<vmem>>, %arg6: memref<16x1xf32, #tpu.memory_space<vmem>>, %arg7: memref<16x16xbf16, #tpu.memory_space<vmem>>, %arg8: memref<16x1xf32, #tpu.memory_space<vmem>>, %arg9: memref<16x16xbf16, #tpu.memory_space<vmem>>, %arg10: memref<1x16xf32, #tpu.memory_space<vmem>>, %arg11: memref<16x16xbf16, #tpu.memory_space<vmem>>, %arg12: memref<1x16xf32, #tpu.memory_space<vmem>>, %arg13: memref<16x16xbf16, #tpu.memory_space<vmem>>, %arg14: memref<16x1xf32, #tpu.memory_space<vmem>>, %arg15: memref<16x16xbf16, #tpu.memory_space<vmem>>, %arg16: memref<16x1xf32, #tpu.memory_space<vmem>>, %arg17: memref<1x16x128xbf16, #tpu.memory_space<vmem>>) attributes {dimension_semantics = [#tpu.dimension_semantics<parallel>, #tpu.dimension_semantics<parallel>], iteration_bounds = array<i64: 2, 2>, scalar_prefetch = 0 : i64, scratch_operands = 0 : i64, tpu.core_type = #tpu.core_type<tc>, window_params = [{transform_indices = @transform_0, window_bounds = array<i64: 1, 16, 128>}, {transform_indices = @transform_1, window_bounds = array<i64: 1, 16, 16>}, {transform_indices = @transform_2, window_bounds = array<i64: 1, 16, 16>}, {pipeline_mode = #tpu.pipeline_mode<synchronous>, transform_indices = @transform_3, window_bounds = array<i64: 16, 16>}, {pipeline_mode = #tpu.pipeline_mode<synchronous>, transform_indices = @transform_4, window_bounds = array<i64: 16, 1>}, {pipeline_mode = #tpu.pipeline_mode<synchronous>, transform_indices = @transform_5, window_bounds = array<i64: 16, 16>}, {pipeline_mode = #tpu.pipeline_mode<synchronous>, transform_indices = @transform_6, window_bounds = array<i64: 16, 1>}, {pipeline_mode = #tpu.pipeline_mode<synchronous>, transform_indices = @transform_7, window_bounds = array<i64: 16, 16>}, {pipeline_mode = #tpu.pipeline_mode<synchronous>, transform_indices = @transform_8, window_bounds = array<i64: 1, 16>}, {pipeline_mode = #tpu.pipeline_mode<synchronous>, transform_indices = @transform_9, window_bounds = array<i64: 16, 16>}, {pipeline_mode = #tpu.pipeline_mode<synchronous>, transform_indices = @transform_10, window_bounds = array<i64: 1, 16>}, {pipeline_mode = #tpu.pipeline_mode<synchronous>, transform_indices = @transform_11, window_bounds = array<i64: 16, 16>}, {pipeline_mode = #tpu.pipeline_mode<synchronous>, transform_indices = @transform_12, window_bounds = array<i64: 16, 1>}, {pipeline_mode = #tpu.pipeline_mode<synchronous>, transform_indices = @transform_13, window_bounds = array<i64: 16, 16>}, {pipeline_mode = #tpu.pipeline_mode<synchronous>, transform_indices = @transform_14, window_bounds = array<i64: 16, 1>}, {transform_indices = @transform_15, window_bounds = array<i64: 1, 16, 128>}]} {
    %c0 = arith.constant 0 : index
    %c0_0 = arith.constant 0 : index
    %c0_1 = arith.constant 0 : index
    %0 = vector.load %arg2[%c0, %c0_0, %c0_1] : memref<1x16x128xbf16, #tpu.memory_space<vmem>>, vector<1x16x128xbf16>
    %1 = vector.shape_cast %0 : vector<1x16x128xbf16> to vector<16x128xbf16>
    %c0_2 = arith.constant 0 : index
    %c0_3 = arith.constant 0 : index
    %c0_4 = arith.constant 0 : index
    %2 = vector.load %arg3[%c0_2, %c0_3, %c0_4] : memref<1x16x16xbf16, #tpu.memory_space<vmem>>, vector<1x16x16xbf16>
    %3 = vector.shape_cast %2 : vector<1x16x16xbf16> to vector<16x16xbf16>
    %c0_5 = arith.constant 0 : index
    %c0_6 = arith.constant 0 : index
    %c0_7 = arith.constant 0 : index
    %4 = vector.load %arg4[%c0_5, %c0_6, %c0_7] : memref<1x16x16xbf16, #tpu.memory_space<vmem>>, vector<1x16x16xbf16>
    %5 = vector.shape_cast %4 : vector<1x16x16xbf16> to vector<16x16xbf16>
    %c0_8 = arith.constant 0 : index
    %c0_9 = arith.constant 0 : index
    %6 = vector.load %arg5[%c0_8, %c0_9] : memref<16x16xbf16, #tpu.memory_space<vmem>>, vector<16x16xbf16>
    %cst = arith.constant dense<0.000000e+00> : vector<16x128xf32>
    %7 = tpu.matmul %6, %1, %cst {dimension_numbers = #tpu.dot_dimension_numbers<[1], [0], [0], [1], [0, 0, 1, 1], [], []>} : vector<16x16xbf16>, vector<16x128xbf16>, vector<16x128xf32> -> vector<16x128xf32>
    %c0_10 = arith.constant 0 : index
    %c0_11 = arith.constant 0 : index
    %8 = vector.load %arg6[%c0_10, %c0_11] : memref<16x1xf32, #tpu.memory_space<vmem>>, vector<16x1xf32>
    %9 = vector.broadcast %8 : vector<16x1xf32> to vector<16x128xf32>
    %10 = arith.addf %7, %9 : vector<16x128xf32>
    %cst_12 = arith.constant 0.000000e+00 : f32
    %11 = vector.broadcast %cst_12 : f32 to vector<16x128xf32>
    %12 = arith.maximumf %10, %11 : vector<16x128xf32>
    %c0_13 = arith.constant 0 : index
    %c0_14 = arith.constant 0 : index
    %13 = vector.load %arg7[%c0_13, %c0_14] : memref<16x16xbf16, #tpu.memory_space<vmem>>, vector<16x16xbf16>
    %14 = arith.truncf %12 : vector<16x128xf32> to vector<16x128xbf16>
    %cst_15 = arith.constant dense<0.000000e+00> : vector<16x128xf32>
    %15 = tpu.matmul %13, %14, %cst_15 {dimension_numbers = #tpu.dot_dimension_numbers<[1], [0], [0], [1], [0, 0, 1, 1], [], []>} : vector<16x16xbf16>, vector<16x128xbf16>, vector<16x128xf32> -> vector<16x128xf32>
    %c0_16 = arith.constant 0 : index
    %c0_17 = arith.constant 0 : index
    %16 = vector.load %arg8[%c0_16, %c0_17] : memref<16x1xf32, #tpu.memory_space<vmem>>, vector<16x1xf32>
    %17 = vector.broadcast %16 : vector<16x1xf32> to vector<16x128xf32>
    %18 = arith.addf %15, %17 : vector<16x128xf32>
    %cst_18 = arith.constant 0.000000e+00 : f32
    %19 = vector.broadcast %cst_18 : f32 to vector<16x128xf32>
    %20 = arith.maximumf %18, %19 : vector<16x128xf32>
    %c0_19 = arith.constant 0 : index
    %c0_20 = arith.constant 0 : index
    %21 = vector.load %arg9[%c0_19, %c0_20] : memref<16x16xbf16, #tpu.memory_space<vmem>>, vector<16x16xbf16>
    %cst_21 = arith.constant dense<0.000000e+00> : vector<16x16xf32>
    %22 = tpu.matmul %3, %21, %cst_21 {dimension_numbers = #tpu.dot_dimension_numbers<[1], [0], [0], [1], [0, 0, 1, 1], [], []>} : vector<16x16xbf16>, vector<16x16xbf16>, vector<16x16xf32> -> vector<16x16xf32>
    %c0_22 = arith.constant 0 : index
    %c0_23 = arith.constant 0 : index
    %23 = vector.load %arg10[%c0_22, %c0_23] : memref<1x16xf32, #tpu.memory_space<vmem>>, vector<1x16xf32>
    %24 = vector.broadcast %23 : vector<1x16xf32> to vector<16x16xf32>
    %25 = arith.addf %22, %24 : vector<16x16xf32>
    %cst_24 = arith.constant 0.000000e+00 : f32
    %26 = vector.broadcast %cst_24 : f32 to vector<16x16xf32>
    %27 = arith.maximumf %25, %26 : vector<16x16xf32>
    %28 = arith.truncf %27 : vector<16x16xf32> to vector<16x16xbf16>
    %c0_25 = arith.constant 0 : index
    %c0_26 = arith.constant 0 : index
    %29 = vector.load %arg11[%c0_25, %c0_26] : memref<16x16xbf16, #tpu.memory_space<vmem>>, vector<16x16xbf16>
    %cst_27 = arith.constant dense<0.000000e+00> : vector<16x16xf32>
    %30 = tpu.matmul %28, %29, %cst_27 {dimension_numbers = #tpu.dot_dimension_numbers<[1], [0], [0], [1], [0, 0, 1, 1], [], []>} : vector<16x16xbf16>, vector<16x16xbf16>, vector<16x16xf32> -> vector<16x16xf32>
    %c0_28 = arith.constant 0 : index
    %c0_29 = arith.constant 0 : index
    %31 = vector.load %arg12[%c0_28, %c0_29] : memref<1x16xf32, #tpu.memory_space<vmem>>, vector<1x16xf32>
    %32 = vector.broadcast %31 : vector<1x16xf32> to vector<16x16xf32>
    %33 = arith.addf %30, %32 : vector<16x16xf32>
    %cst_30 = arith.constant 0.000000e+00 : f32
    %34 = vector.broadcast %cst_30 : f32 to vector<16x16xf32>
    %35 = arith.maximumf %33, %34 : vector<16x16xf32>
    %c0_31 = arith.constant 0 : index
    %c0_32 = arith.constant 0 : index
    %36 = vector.load %arg13[%c0_31, %c0_32] : memref<16x16xbf16, #tpu.memory_space<vmem>>, vector<16x16xbf16>
    %cst_33 = arith.constant dense<0.000000e+00> : vector<16x16xf32>
    %37 = tpu.matmul %36, %5, %cst_33 {dimension_numbers = #tpu.dot_dimension_numbers<[1], [0], [0], [1], [0, 0, 1, 1], [], []>} : vector<16x16xbf16>, vector<16x16xbf16>, vector<16x16xf32> -> vector<16x16xf32>
    %c0_34 = arith.constant 0 : index
    %c0_35 = arith.constant 0 : index
    %38 = vector.load %arg14[%c0_34, %c0_35] : memref<16x1xf32, #tpu.memory_space<vmem>>, vector<16x1xf32>
    %39 = vector.broadcast %38 : vector<16x1xf32> to vector<16x16xf32>
    %40 = arith.addf %37, %39 : vector<16x16xf32>
    %cst_36 = arith.constant 0.000000e+00 : f32
    %41 = vector.broadcast %cst_36 : f32 to vector<16x16xf32>
    %42 = arith.maximumf %40, %41 : vector<16x16xf32>
    %43 = arith.truncf %35 : vector<16x16xf32> to vector<16x16xbf16>
    %44 = arith.truncf %20 : vector<16x128xf32> to vector<16x128xbf16>
    %cst_37 = arith.constant dense<0.000000e+00> : vector<16x128xf32>
    %45 = tpu.matmul %43, %44, %cst_37 {dimension_numbers = #tpu.dot_dimension_numbers<[1], [0], [0], [1], [0, 0, 1, 1], [], []>} : vector<16x16xbf16>, vector<16x128xbf16>, vector<16x128xf32> -> vector<16x128xf32>
    %46 = tpu.iota {dimensions = array<i32: 0>} : vector<16x128xi32>
    %c8_i32 = arith.constant 8 : i32
    %47 = vector.broadcast %c8_i32 : i32 to vector<16x128xi32>
    %48 = arith.cmpi slt, %46, %47 : vector<16x128xi32>
    %cst_38 = arith.constant -1.000000e+30 : f32
    %49 = vector.broadcast %cst_38 : f32 to vector<16x128xf32>
    %50 = arith.select %48, %45, %49 : vector<16x128xi1>, vector<16x128xf32>
    %cst_39 = arith.constant dense<0xFF800000> : vector<128xf32>
    %51 = vector.multi_reduction <maximumf>, %50, %cst_39 [0] : vector<16x128xf32> to vector<128xf32>
    %52 = vector.shape_cast %51 : vector<128xf32> to vector<1x128xf32>
    %53 = vector.broadcast %52 : vector<1x128xf32> to vector<16x128xf32>
    %54 = arith.subf %50, %53 : vector<16x128xf32>
    %55 = math.exp %54 : vector<16x128xf32>
    %cst_40 = arith.constant dense<0.000000e+00> : vector<128xf32>
    %56 = vector.multi_reduction <add>, %55, %cst_40 [0] : vector<16x128xf32> to vector<128xf32>
    %57 = vector.shape_cast %56 : vector<128xf32> to vector<1x128xf32>
    %58 = tpu.reciprocal %57 {approx = true} : vector<1x128xf32> -> vector<1x128xf32>
    %59 = vector.broadcast %58 : vector<1x128xf32> to vector<16x128xf32>
    %60 = arith.mulf %55, %59 : vector<16x128xf32>
    %61 = arith.truncf %42 : vector<16x16xf32> to vector<16x16xbf16>
    %62 = arith.truncf %60 : vector<16x128xf32> to vector<16x128xbf16>
    %cst_41 = arith.constant dense<0.000000e+00> : vector<16x128xf32>
    %63 = tpu.matmul %61, %62, %cst_41 {dimension_numbers = #tpu.dot_dimension_numbers<[1], [0], [0], [1], [0, 0, 1, 1], [], []>} : vector<16x16xbf16>, vector<16x128xbf16>, vector<16x128xf32> -> vector<16x128xf32>
    %c0_42 = arith.constant 0 : index
    %c0_43 = arith.constant 0 : index
    %64 = vector.load %arg15[%c0_42, %c0_43] : memref<16x16xbf16, #tpu.memory_space<vmem>>, vector<16x16xbf16>
    %65 = arith.truncf %63 : vector<16x128xf32> to vector<16x128xbf16>
    %cst_44 = arith.constant dense<0.000000e+00> : vector<16x128xf32>
    %66 = tpu.matmul %64, %65, %cst_44 {dimension_numbers = #tpu.dot_dimension_numbers<[1], [0], [0], [1], [0, 0, 1, 1], [], []>} : vector<16x16xbf16>, vector<16x128xbf16>, vector<16x128xf32> -> vector<16x128xf32>
    %c0_45 = arith.constant 0 : index
    %c0_46 = arith.constant 0 : index
    %67 = vector.load %arg16[%c0_45, %c0_46] : memref<16x1xf32, #tpu.memory_space<vmem>>, vector<16x1xf32>
    %68 = vector.broadcast %67 : vector<16x1xf32> to vector<16x128xf32>
    %69 = arith.addf %66, %68 : vector<16x128xf32>
    %cst_47 = arith.constant 0.000000e+00 : f32
    %70 = vector.broadcast %cst_47 : f32 to vector<16x128xf32>
    %71 = arith.maximumf %69, %70 : vector<16x128xf32>
    %72 = arith.truncf %71 : vector<16x128xf32> to vector<16x128xbf16>
    %c0_48 = arith.constant 0 : index
    %c0_49 = arith.constant 0 : index
    %c0_50 = arith.constant 0 : index
    %73 = vector.load %arg17[%c0_48, %c0_49, %c0_50] : memref<1x16x128xbf16, #tpu.memory_space<vmem>>, vector<1x16x128xbf16>
    %74 = vector.shape_cast %73 : vector<1x16x128xbf16> to vector<16x128xbf16>
    %75 = vector.shape_cast %72 : vector<16x128xbf16> to vector<1x16x128xbf16>
    tpu.vector_store %arg17[%c0_48, %c0_49, %c0_50], %75 {strides = array<i32>} : memref<1x16x128xbf16, #tpu.memory_space<vmem>>, vector<1x16x128xbf16>,
    return
  }
  func.func @transform_0(%arg0: i32, %arg1: i32) -> (i32, i32, i32) {
    %c0_i32 = arith.constant 0 : i32
    %c0_i32_0 = arith.constant 0 : i32
    return %arg0, %c0_i32, %arg1 : i32, i32, i32
  }
  func.func @transform_1(%arg0: i32, %arg1: i32) -> (i32, i32, i32) {
    %c0_i32 = arith.constant 0 : i32
    %c0_i32_0 = arith.constant 0 : i32
    %c0_i32_1 = arith.constant 0 : i32
    return %arg0, %c0_i32, %c0_i32_0 : i32, i32, i32
  }
  func.func @transform_2(%arg0: i32, %arg1: i32) -> (i32, i32, i32) {
    %c0_i32 = arith.constant 0 : i32
    %c0_i32_0 = arith.constant 0 : i32
    %c0_i32_1 = arith.constant 0 : i32
    return %arg0, %c0_i32, %c0_i32_0 : i32, i32, i32
  }
  func.func @transform_3(%arg0: i32, %arg1: i32) -> (i32, i32) {
    %c0_i32 = arith.constant 0 : i32
    %c0_i32_0 = arith.constant 0 : i32
    %c0_i32_1 = arith.constant 0 : i32
    return %c0_i32, %c0_i32_0 : i32, i32
  }
  func.func @transform_4(%arg0: i32, %arg1: i32) -> (i32, i32) {
    %c0_i32 = arith.constant 0 : i32
    %c0_i32_0 = arith.constant 0 : i32
    %c0_i32_1 = arith.constant 0 : i32
    return %c0_i32, %c0_i32_0 : i32, i32
  }
  func.func @transform_5(%arg0: i32, %arg1: i32) -> (i32, i32) {
    %c0_i32 = arith.constant 0 : i32
    %c0_i32_0 = arith.constant 0 : i32
    %c0_i32_1 = arith.constant 0 : i32
    return %c0_i32, %c0_i32_0 : i32, i32
  }
  func.func @transform_6(%arg0: i32, %arg1: i32) -> (i32, i32) {
    %c0_i32 = arith.constant 0 : i32
    %c0_i32_0 = arith.constant 0 : i32
    %c0_i32_1 = arith.constant 0 : i32
    return %c0_i32, %c0_i32_0 : i32, i32
  }
  func.func @transform_7(%arg0: i32, %arg1: i32) -> (i32, i32) {
    %c0_i32 = arith.constant 0 : i32
    %c0_i32_0 = arith.constant 0 : i32
    %c0_i32_1 = arith.constant 0 : i32
    return %c0_i32, %c0_i32_0 : i32, i32
  }
  func.func @transform_8(%arg0: i32, %arg1: i32) -> (i32, i32) {
    %c0_i32 = arith.constant 0 : i32
    %c0_i32_0 = arith.constant 0 : i32
    %c0_i32_1 = arith.constant 0 : i32
    return %c0_i32, %c0_i32_0 : i32, i32
  }
  func.func @transform_9(%arg0: i32, %arg1: i32) -> (i32, i32) {
    %c0_i32 = arith.constant 0 : i32
    %c0_i32_0 = arith.constant 0 : i32
    %c0_i32_1 = arith.constant 0 : i32
    return %c0_i32, %c0_i32_0 : i32, i32
  }
  func.func @transform_10(%arg0: i32, %arg1: i32) -> (i32, i32) {
    %c0_i32 = arith.constant 0 : i32
    %c0_i32_0 = arith.constant 0 : i32
    %c0_i32_1 = arith.constant 0 : i32
    return %c0_i32, %c0_i32_0 : i32, i32
  }
  func.func @transform_11(%arg0: i32, %arg1: i32) -> (i32, i32) {
    %c0_i32 = arith.constant 0 : i32
    %c0_i32_0 = arith.constant 0 : i32
    %c0_i32_1 = arith.constant 0 : i32
    return %c0_i32, %c0_i32_0 : i32, i32
  }
  func.func @transform_12(%arg0: i32, %arg1: i32) -> (i32, i32) {
    %c0_i32 = arith.constant 0 : i32
    %c0_i32_0 = arith.constant 0 : i32
    %c0_i32_1 = arith.constant 0 : i32
    return %c0_i32, %c0_i32_0 : i32, i32
  }
  func.func @transform_13(%arg0: i32, %arg1: i32) -> (i32, i32) {
    %c0_i32 = arith.constant 0 : i32
    %c0_i32_0 = arith.constant 0 : i32
    %c0_i32_1 = arith.constant 0 : i32
    return %c0_i32, %c0_i32_0 : i32, i32
  }
  func.func @transform_14(%arg0: i32, %arg1: i32) -> (i32, i32) {
    %c0_i32 = arith.constant 0 : i32
    %c0_i32_0 = arith.constant 0 : i32
    %c0_i32_1 = arith.constant 0 : i32
    return %c0_i32, %c0_i32_0 : i32, i32
  }
  func.func @transform_15(%arg0: i32, %arg1: i32) -> (i32, i32, i32) {
    %c0_i32 = arith.constant 0 : i32
    %c0_i32_0 = arith.constant 0 : i32
    return %arg0, %c0_i32, %arg1 : i32, i32, i32
  }
}

</mosaic_0001>

<llo_original>
// kernel: tpu_custom_call.1
$region0: #{tpu_custom_call.1}
  #allocation0 [shape = 'u32[]', space=smem, size = 0x4, offset = 0x4, fixed_abs, tag = 'smem constant byte address 0x4 - core index']
  #allocation1 [shape = 'u32[144,128]{1,0:T(1,128)}', space=vmem, size = 0x12000, scoped, tag = 'internal scratch']
  %s0 = inlined_call_operand.hbm [shape: bf16[2,16,256], index: 0, kind: input, shape index: {}]
  %s1 = inlined_call_operand.hbm [shape: bf16[2,16,16], index: 1, kind: input, shape index: {}]
  %s2 = inlined_call_operand.hbm [shape: bf16[2,16,16], index: 2, kind: input, shape index: {}]
  %s3 = inlined_call_operand.hbm [shape: bf16[16,16], index: 3, kind: input, shape index: {}]
  %s4 = inlined_call_operand.hbm [shape: f32[16,1], index: 4, kind: input, shape index: {}]
  %s5 = inlined_call_operand.hbm [shape: bf16[16,16], index: 5, kind: input, shape index: {}]
  %s6 = inlined_call_operand.hbm [shape: f32[16,1], index: 6, kind: input, shape index: {}]
  %s7 = inlined_call_operand.hbm [shape: bf16[16,16], index: 7, kind: input, shape index: {}]
  %s8 = inlined_call_operand.hbm [shape: f32[1,16], index: 8, kind: input, shape index: {}]
  %s9 = inlined_call_operand.hbm [shape: bf16[16,16], index: 9, kind: input, shape index: {}]
  %s10 = inlined_call_operand.hbm [shape: f32[1,16], index: 10, kind: input, shape index: {}]
  %s11 = inlined_call_operand.hbm [shape: bf16[16,16], index: 11, kind: input, shape index: {}]
  %s12 = inlined_call_operand.hbm [shape: f32[16,1], index: 12, kind: input, shape index: {}]
  %s13 = inlined_call_operand.hbm [shape: bf16[16,16], index: 13, kind: input, shape index: {}]
  %s14 = inlined_call_operand.hbm [shape: f32[16,1], index: 14, kind: input, shape index: {}]
  %s15 = inlined_call_operand.hbm [shape: bf16[2,16,256], index: 15, kind: output, shape index: {}]
  %s16 = sld [smem:[#allocation0]]
  $region153: #{tpu_custom_call.1} parent=0
    _
  %s18 = ssub.s32 1, %s16
  %s19 = scalar_select 0, %s18, %s16
  $region1: #{tpu_custom_call.1} parent=0
    #allocation2 [shape = 'u8[8192]{0}', space=vmem, size = 0x2000, scoped, tag = 'input window, operand 0']
    #allocation3 [shape = 's32[2]{0}', space=sflag, size = 0x8, scoped, tag = 'scoped memory for tpu_custom_call.1']
    #allocation4 [shape = 's32[2]{0}', space=sflag, size = 0x8, scoped, tag = 'scoped memory for tpu_custom_call.1']
    #allocation5 [shape = 'u8[8192]{0}', space=vmem, size = 0x2000, scoped, tag = 'input window, operand 1']
    #allocation6 [shape = 's32[2]{0}', space=sflag, size = 0x8, scoped, tag = 'scoped memory for tpu_custom_call.1']
    #allocation7 [shape = 'u8[8192]{0}', space=vmem, size = 0x2000, scoped, tag = 'input window, operand 2']
    #allocation8 [shape = 'u8[4096]{0}', space=vmem, size = 0x1000, scoped, tag = 'input window, operand 3, single buffered']
    #allocation9 [shape = 's32[1]{0}', space=sflag, size = 0x4, scoped, tag = 'scoped memory for tpu_custom_call.1']
    #allocation10 [shape = 'u8[8192]{0}', space=vmem, size = 0x2000, scoped, tag = 'input window, operand 4, single buffered']
    #allocation11 [shape = 'u8[4096]{0}', space=vmem, size = 0x1000, scoped, tag = 'input window, operand 5, single buffered']
    #allocation12 [shape = 's32[1]{0}', space=sflag, size = 0x4, scoped, tag = 'scoped memory for tpu_custom_call.1']
    #allocation13 [shape = 'u8[8192]{0}', space=vmem, size = 0x2000, scoped, tag = 'input window, operand 6, single buffered']
    #allocation14 [shape = 'u8[4096]{0}', space=vmem, size = 0x1000, scoped, tag = 'input window, operand 7, single buffered']
    #allocation15 [shape = 's32[1]{0}', space=sflag, size = 0x4, scoped, tag = 'scoped memory for tpu_custom_call.1']
    #allocation16 [shape = 'u8[512]{0}', space=vmem, size = 0x400, scoped, tag = 'input window, operand 8, single buffered']
    #allocation17 [shape = 'u8[4096]{0}', space=vmem, size = 0x1000, scoped, tag = 'input window, operand 9, single buffered']
    #allocation18 [shape = 's32[1]{0}', space=sflag, size = 0x4, scoped, tag = 'scoped memory for tpu_custom_call.1']
    #allocation19 [shape = 'u8[512]{0}', space=vmem, size = 0x400, scoped, tag = 'input window, operand 10, single buffered']
    #allocation20 [shape = 'u8[4096]{0}', space=vmem, size = 0x1000, scoped, tag = 'input window, operand 11, single buffered']
    #allocation21 [shape = 's32[1]{0}', space=sflag, size = 0x4, scoped, tag = 'scoped memory for tpu_custom_call.1']
    #allocation22 [shape = 'u8[8192]{0}', space=vmem, size = 0x2000, scoped, tag = 'input window, operand 12, single buffered']
    #allocation23 [shape = 'u8[4096]{0}', space=vmem, size = 0x1000, scoped, tag = 'input window, operand 13, single buffered']
    #allocation24 [shape = 's32[1]{0}', space=sflag, size = 0x4, scoped, tag = 'scoped memory for tpu_custom_call.1']
    #allocation25 [shape = 'u8[8192]{0}', space=vmem, size = 0x2000, scoped, tag = 'input window, operand 14, single buffered']
    #allocation26 [shape = 'u8[8192]{0}', space=vmem, size = 0x2000, scoped, tag = 'output window, operand 0']
    %20 = vsyncpa [#allocation3], 0
    %s21 = scalar_lea.sflag [#allocation3], 1
    %22 = vsyncpa %s21, 0
    %23 = vsyncpa [#allocation6], 0
    %s24 = scalar_lea.sflag [#allocation6], 1
    %25 = vsyncpa %s24, 0
    %26 = vsyncpa [#allocation9], 0
    %27 = vsyncpa [#allocation12], 0
    %28 = vsyncpa [#allocation15], 0
    %29 = vsyncpa [#allocation18], 0
    %30 = vsyncpa [#allocation21], 0
    %31 = vsyncpa [#allocation24], 0
    %32 = vsyncpa [#allocation4], 0
    %s33 = scalar_lea.sflag [#allocation4], 1
    %34 = vsyncpa %s33, 0
    loop: start=0, step=1, limit=6
    $region2: #{tpu_custom_call.1} parent=1 // loop_pre_header
      _
    $region3: #{tpu_custom_call.1} parent=1 // loop_header
      %s36 = sphi 0, %s40
      %p37 = scmp.ge.s32.totalorder %s36, 6
      %s43 = sphi 0, %s55
      %s44 = sphi 0, %s51
      %s45 = sphi 0, %s43
      %s46 = sphi 0, %s44
      %s47 = sphi 0, %s45
      %s48 = sphi 0, %s46
      %s60 = sphi 0, %s62
      %s63 = sphi 0, %s60
      %s64 = sphi 0, %s63
      %s80 = sphi 0, %s64
      %s86 = sphi 0, %s88
      %s89 = sphi 0, %s86
      %s90 = sphi 0, %s89
      %s106 = sphi 0, %s90
      %s112 = sphi 0, %s114
      %s115 = sphi 0, %s112
      %s116 = sphi 0, %s115
      %s132 = sphi 0, %s116
      %s136 = sphi 0, %s136
      %s138 = sphi 0, %s136
      %s139 = sphi 0, %s138
      %s153 = sphi 0, %s139
      %s157 = sphi 0, %s157
      %s159 = sphi 0, %s157
      %s160 = sphi 0, %s159
      %s174 = sphi 0, %s160
      %s178 = sphi 0, %s178
      %s180 = sphi 0, %s178
      %s181 = sphi 0, %s180
      %s195 = sphi 0, %s181
      %s199 = sphi 0, %s199
      %s201 = sphi 0, %s199
      %s202 = sphi 0, %s201
      %s216 = sphi 0, %s202
      %s220 = sphi 0, %s220
      %s222 = sphi 0, %s220
      %s223 = sphi 0, %s222
      %s237 = sphi 0, %s223
      %s241 = sphi 0, %s241
      %s243 = sphi 0, %s241
      %s244 = sphi 0, %s243
      %s258 = sphi 0, %s244
      %s262 = sphi 0, %s262
      %s264 = sphi 0, %s262
      %s265 = sphi 0, %s264
      %s279 = sphi 0, %s265
      %s283 = sphi 0, %s283
      %s285 = sphi 0, %s283
      %s286 = sphi 0, %s285
      %s300 = sphi 0, %s286
      %s304 = sphi 0, %s304
      %s306 = sphi 0, %s304
      %s307 = sphi 0, %s306
      %s321 = sphi 0, %s307
      %s325 = sphi 0, %s325
      %s327 = sphi 0, %s325
      %s328 = sphi 0, %s327
      %s342 = sphi 0, %s328
      %s346 = sphi 0, %s346
      %s348 = sphi 0, %s346
      %s349 = sphi 0, %s348
      %s363 = sphi 0, %s349
      %s367 = sphi 0, %s367
      %s369 = sphi 0, %s367
      %s370 = sphi 0, %s369
      %s384 = sphi 0, %s370
      %s392 = sphi 0, %s394
      %s395 = sphi 0, %s392
      %s396 = sphi 0, %s395
      %s412 = sphi 0, %s396
    $region4: #{tpu_custom_call.1} parent=1 // loop_header_branch
      %39 = sbr.rel (%p37) target = $region8
    $region5: #{tpu_custom_call.1} parent=1 // loop_body
      %s41 = ssub.s32 %s36, 1
      %s42 = ssub.s32 %s36, 2
      %s49 = sadd.s32 1, %s44
      %p50 = scmp.ge.s32.totalorder %s49, 2
      %s51 = scalar_select %p50, 0, %s49
      %s52 = sadd.s32 1, %s43
      %s53 = scalar_select %p50, %s52, %s43
      %p54 = scmp.ge.s32.totalorder %s53, 2
      %s55 = scalar_select %p54, 0, %s53
      %s56 = ssub.s32 %s43, %s55
      %s57 = ssub.s32 %s44, %s51
      %s58 = sor.u32 %s56, %s57
      %p59 = scmp.eq.s32.totalorder %s58, 0
      %s61 = sadd.s32 %s60, 1
      %s62 = scalar_select %p59, %s60, %s61
      %p65 = pneg %p59
      %p66 = scmp.eq.s32.totalorder %s36, 3
      %p67 = por %p65, %p66
      %p68 = scmp.ne.s32.totalorder %s60, %s63
      %p69 = scmp.eq.s32.totalorder %s36, 0
      %p70 = por %p68, %p69
      %p71 = scmp.ne.s32.totalorder %s60, %s63
      %p72 = scmp.eq.s32.totalorder %s41, 3
      %p73 = por %p71, %p72
      %p74 = scmp.ne.s32.totalorder %s63, %s64
      %p75 = scmp.eq.s32.totalorder %s41, 0
      %p76 = por %p74, %p75
      %p77 = scmp.ne.s32.totalorder %s63, %s64
      %p78 = scmp.eq.s32.totalorder %s42, 3
      %p79 = por %p77, %p78
      %p81 = scmp.ne.s32.totalorder %s64, %s80
      %p82 = scmp.eq.s32.totalorder %s42, 0
      %p83 = por %p81, %p82
      %s84 = ssub.s32 %s43, %s55
      %p85 = scmp.eq.s32.totalorder %s84, 0
      %s87 = sadd.s32 %s86, 1
      %s88 = scalar_select %p85, %s86, %s87
      %p91 = pneg %p85
      %p92 = scmp.eq.s32.totalorder %s36, 3
      %p93 = por %p91, %p92
      %p94 = scmp.ne.s32.totalorder %s86, %s89
      %p95 = scmp.eq.s32.totalorder %s36, 0
      %p96 = por %p94, %p95
      %p97 = scmp.ne.s32.totalorder %s86, %s89
      %p98 = scmp.eq.s32.totalorder %s41, 3
      %p99 = por %p97, %p98
      %p100 = scmp.ne.s32.totalorder %s89, %s90
      %p101 = scmp.eq.s32.totalorder %s41, 0
      %p102 = por %p100, %p101
      %p103 = scmp.ne.s32.totalorder %s89, %s90
      %p104 = scmp.eq.s32.totalorder %s42, 3
      %p105 = por %p103, %p104
      %p107 = scmp.ne.s32.totalorder %s90, %s106
      %p108 = scmp.eq.s32.totalorder %s42, 0
      %p109 = por %p107, %p108
      %s110 = ssub.s32 %s43, %s55
      %p111 = scmp.eq.s32.totalorder %s110, 0
      %s113 = sadd.s32 %s112, 1
      %s114 = scalar_select %p111, %s112, %s113
      %p117 = pneg %p111
      %p118 = scmp.eq.s32.totalorder %s36, 3
      %p119 = por %p117, %p118
      %p120 = scmp.ne.s32.totalorder %s112, %s115
      %p121 = scmp.eq.s32.totalorder %s36, 0
      %p122 = por %p120, %p121
      %p123 = scmp.ne.s32.totalorder %s112, %s115
      %p124 = scmp.eq.s32.totalorder %s41, 3
      %p125 = por %p123, %p124
      %p126 = scmp.ne.s32.totalorder %s115, %s116
      %p127 = scmp.eq.s32.totalorder %s41, 0
      %p128 = por %p126, %p127
      %p129 = scmp.ne.s32.totalorder %s115, %s116
      %p130 = scmp.eq.s32.totalorder %s42, 3
      %p131 = por %p129, %p130
      %p133 = scmp.ne.s32.totalorder %s116, %s132
      %p134 = scmp.eq.s32.totalorder %s42, 0
      %p135 = por %p133, %p134
      %s137 = sadd.s32 %s136, 1
      %p140 = scmp.eq.s32.totalorder %s36, 3
      %p141 = scmp.ne.s32.totalorder %s136, %s138
      %p142 = scmp.eq.s32.totalorder %s36, 0
      %p143 = por %p141, %p142
      %p144 = scmp.ne.s32.totalorder %s136, %s138
      %p145 = scmp.eq.s32.totalorder %s41, 3
      %p146 = por %p144, %p145
      %p147 = scmp.ne.s32.totalorder %s138, %s139
      %p148 = scmp.eq.s32.totalorder %s41, 0
      %p149 = por %p147, %p148
      %p150 = scmp.ne.s32.totalorder %s138, %s139
      %p151 = scmp.eq.s32.totalorder %s42, 3
      %p152 = por %p150, %p151
      %p154 = scmp.ne.s32.totalorder %s139, %s153
      %p155 = scmp.eq.s32.totalorder %s42, 0
      %p156 = por %p154, %p155
      %s158 = sadd.s32 %s157, 1
      %p161 = scmp.eq.s32.totalorder %s36, 3
      %p162 = scmp.ne.s32.totalorder %s157, %s159
      %p163 = scmp.eq.s32.totalorder %s36, 0
      %p164 = por %p162, %p163
      %p165 = scmp.ne.s32.totalorder %s157, %s159
      %p166 = scmp.eq.s32.totalorder %s41, 3
      %p167 = por %p165, %p166
      %p168 = scmp.ne.s32.totalorder %s159, %s160
      %p169 = scmp.eq.s32.totalorder %s41, 0
      %p170 = por %p168, %p169
      %p171 = scmp.ne.s32.totalorder %s159, %s160
      %p172 = scmp.eq.s32.totalorder %s42, 3
      %p173 = por %p171, %p172
      %p175 = scmp.ne.s32.totalorder %s160, %s174
      %p176 = scmp.eq.s32.totalorder %s42, 0
      %p177 = por %p175, %p176
      %s179 = sadd.s32 %s178, 1
      %p182 = scmp.eq.s32.totalorder %s36, 3
      %p183 = scmp.ne.s32.totalorder %s178, %s180
      %p184 = scmp.eq.s32.totalorder %s36, 0
      %p185 = por %p183, %p184
      %p186 = scmp.ne.s32.totalorder %s178, %s180
      %p187 = scmp.eq.s32.totalorder %s41, 3
      %p188 = por %p186, %p187
      %p189 = scmp.ne.s32.totalorder %s180, %s181
      %p190 = scmp.eq.s32.totalorder %s41, 0
      %p191 = por %p189, %p190
      %p192 = scmp.ne.s32.totalorder %s180, %s181
      %p193 = scmp.eq.s32.totalorder %s42, 3
      %p194 = por %p192, %p193
      %p196 = scmp.ne.s32.totalorder %s181, %s195
      %p197 = scmp.eq.s32.totalorder %s42, 0
      %p198 = por %p196, %p197
      %s200 = sadd.s32 %s199, 1
      %p203 = scmp.eq.s32.totalorder %s36, 3
      %p204 = scmp.ne.s32.totalorder %s199, %s201
      %p205 = scmp.eq.s32.totalorder %s36, 0
      %p206 = por %p204, %p205
      %p207 = scmp.ne.s32.totalorder %s199, %s201
      %p208 = scmp.eq.s32.totalorder %s41, 3
      %p209 = por %p207, %p208
      %p210 = scmp.ne.s32.totalorder %s201, %s202
      %p211 = scmp.eq.s32.totalorder %s41, 0
      %p212 = por %p210, %p211
      %p213 = scmp.ne.s32.totalorder %s201, %s202
      %p214 = scmp.eq.s32.totalorder %s42, 3
      %p215 = por %p213, %p214
      %p217 = scmp.ne.s32.totalorder %s202, %s216
      %p218 = scmp.eq.s32.totalorder %s42, 0
      %p219 = por %p217, %p218
      %s221 = sadd.s32 %s220, 1
      %p224 = scmp.eq.s32.totalorder %s36, 3
      %p225 = scmp.ne.s32.totalorder %s220, %s222
      %p226 = scmp.eq.s32.totalorder %s36, 0
      %p227 = por %p225, %p226
      %p228 = scmp.ne.s32.totalorder %s220, %s222
      %p229 = scmp.eq.s32.totalorder %s41, 3
      %p230 = por %p228, %p229
      %p231 = scmp.ne.s32.totalorder %s222, %s223
      %p232 = scmp.eq.s32.totalorder %s41, 0
      %p233 = por %p231, %p232
      %p234 = scmp.ne.s32.totalorder %s222, %s223
      %p235 = scmp.eq.s32.totalorder %s42, 3
      %p236 = por %p234, %p235
      %p238 = scmp.ne.s32.totalorder %s223, %s237
      %p239 = scmp.eq.s32.totalorder %s42, 0
      %p240 = por %p238, %p239
      %s242 = sadd.s32 %s241, 1
      %p245 = scmp.eq.s32.totalorder %s36, 3
      %p246 = scmp.ne.s32.totalorder %s241, %s243
      %p247 = scmp.eq.s32.totalorder %s36, 0
      %p248 = por %p246, %p247
      %p249 = scmp.ne.s32.totalorder %s241, %s243
      %p250 = scmp.eq.s32.totalorder %s41, 3
      %p251 = por %p249, %p250
      %p252 = scmp.ne.s32.totalorder %s243, %s244
      %p253 = scmp.eq.s32.totalorder %s41, 0
      %p254 = por %p252, %p253
      %p255 = scmp.ne.s32.totalorder %s243, %s244
      %p256 = scmp.eq.s32.totalorder %s42, 3
      %p257 = por %p255, %p256
      %p259 = scmp.ne.s32.totalorder %s244, %s258
      %p260 = scmp.eq.s32.totalorder %s42, 0
      %p261 = por %p259, %p260
      %s263 = sadd.s32 %s262, 1
      %p266 = scmp.eq.s32.totalorder %s36, 3
      %p267 = scmp.ne.s32.totalorder %s262, %s264
      %p268 = scmp.eq.s32.totalorder %s36, 0
      %p269 = por %p267, %p268
      %p270 = scmp.ne.s32.totalorder %s262, %s264
      %p271 = scmp.eq.s32.totalorder %s41, 3
      %p272 = por %p270, %p271
      %p273 = scmp.ne.s32.totalorder %s264, %s265
      %p274 = scmp.eq.s32.totalorder %s41, 0
      %p275 = por %p273, %p274
      %p276 = scmp.ne.s32.totalorder %s264, %s265
      %p277 = scmp.eq.s32.totalorder %s42, 3
      %p278 = por %p276, %p277
      %p280 = scmp.ne.s32.totalorder %s265, %s279
      %p281 = scmp.eq.s32.totalorder %s42, 0
      %p282 = por %p280, %p281
      %s284 = sadd.s32 %s283, 1
      %p287 = scmp.eq.s32.totalorder %s36, 3
      %p288 = scmp.ne.s32.totalorder %s283, %s285
      %p289 = scmp.eq.s32.totalorder %s36, 0
      %p290 = por %p288, %p289
      %p291 = scmp.ne.s32.totalorder %s283, %s285
      %p292 = scmp.eq.s32.totalorder %s41, 3
      %p293 = por %p291, %p292
      %p294 = scmp.ne.s32.totalorder %s285, %s286
      %p295 = scmp.eq.s32.totalorder %s41, 0
      %p296 = por %p294, %p295
      %p297 = scmp.ne.s32.totalorder %s285, %s286
      %p298 = scmp.eq.s32.totalorder %s42, 3
      %p299 = por %p297, %p298
      %p301 = scmp.ne.s32.totalorder %s286, %s300
      %p302 = scmp.eq.s32.totalorder %s42, 0
      %p303 = por %p301, %p302
      %s305 = sadd.s32 %s304, 1
      %p308 = scmp.eq.s32.totalorder %s36, 3
      %p309 = scmp.ne.s32.totalorder %s304, %s306
      %p310 = scmp.eq.s32.totalorder %s36, 0
      %p311 = por %p309, %p310
      %p312 = scmp.ne.s32.totalorder %s304, %s306
      %p313 = scmp.eq.s32.totalorder %s41, 3
      %p314 = por %p312, %p313
      %p315 = scmp.ne.s32.totalorder %s306, %s307
      %p316 = scmp.eq.s32.totalorder %s41, 0
      %p317 = por %p315, %p316
      %p318 = scmp.ne.s32.totalorder %s306, %s307
      %p319 = scmp.eq.s32.totalorder %s42, 3
      %p320 = por %p318, %p319
      %p322 = scmp.ne.s32.totalorder %s307, %s321
      %p323 = scmp.eq.s32.totalorder %s42, 0
      %p324 = por %p322, %p323
      %s326 = sadd.s32 %s325, 1
      %p329 = scmp.eq.s32.totalorder %s36, 3
      %p330 = scmp.ne.s32.totalorder %s325, %s327
      %p331 = scmp.eq.s32.totalorder %s36, 0
      %p332 = por %p330, %p331
      %p333 = scmp.ne.s32.totalorder %s325, %s327
      %p334 = scmp.eq.s32.totalorder %s41, 3
      %p335 = por %p333, %p334
      %p336 = scmp.ne.s32.totalorder %s327, %s328
      %p337 = scmp.eq.s32.totalorder %s41, 0
      %p338 = por %p336, %p337
      %p339 = scmp.ne.s32.totalorder %s327, %s328
      %p340 = scmp.eq.s32.totalorder %s42, 3
      %p341 = por %p339, %p340
      %p343 = scmp.ne.s32.totalorder %s328, %s342
      %p344 = scmp.eq.s32.totalorder %s42, 0
      %p345 = por %p343, %p344
      %s347 = sadd.s32 %s346, 1
      %p350 = scmp.eq.s32.totalorder %s36, 3
      %p351 = scmp.ne.s32.totalorder %s346, %s348
      %p352 = scmp.eq.s32.totalorder %s36, 0
      %p353 = por %p351, %p352
      %p354 = scmp.ne.s32.totalorder %s346, %s348
      %p355 = scmp.eq.s32.totalorder %s41, 3
      %p356 = por %p354, %p355
      %p357 = scmp.ne.s32.totalorder %s348, %s349
      %p358 = scmp.eq.s32.totalorder %s41, 0
      %p359 = por %p357, %p358
      %p360 = scmp.ne.s32.totalorder %s348, %s349
      %p361 = scmp.eq.s32.totalorder %s42, 3
      %p362 = por %p360, %p361
      %p364 = scmp.ne.s32.totalorder %s349, %s363
      %p365 = scmp.eq.s32.totalorder %s42, 0
      %p366 = por %p364, %p365
      %s368 = sadd.s32 %s367, 1
      %p371 = scmp.eq.s32.totalorder %s36, 3
      %p372 = scmp.ne.s32.totalorder %s367, %s369
      %p373 = scmp.eq.s32.totalorder %s36, 0
      %p374 = por %p372, %p373
      %p375 = scmp.ne.s32.totalorder %s367, %s369
      %p376 = scmp.eq.s32.totalorder %s41, 3
      %p377 = por %p375, %p376
      %p378 = scmp.ne.s32.totalorder %s369, %s370
      %p379 = scmp.eq.s32.totalorder %s41, 0
      %p380 = por %p378, %p379
      %p381 = scmp.ne.s32.totalorder %s369, %s370
      %p382 = scmp.eq.s32.totalorder %s42, 3
      %p383 = por %p381, %p382
      %p385 = scmp.ne.s32.totalorder %s370, %s384
      %p386 = scmp.eq.s32.totalorder %s42, 0
      %p387 = por %p385, %p386
      %s388 = ssub.s32 %s43, %s55
      %s389 = ssub.s32 %s44, %s51
      %s390 = sor.u32 %s388, %s389
      %p391 = scmp.eq.s32.totalorder %s390, 0
      %s393 = sadd.s32 %s392, 1
      %s394 = scalar_select %p391, %s392, %s393
      %p397 = pneg %p391
      %p398 = scmp.eq.s32.totalorder %s36, 3
      %p399 = por %p397, %p398
      %p400 = scmp.ne.s32.totalorder %s392, %s395
      %p401 = scmp.eq.s32.totalorder %s36, 0
      %p402 = por %p400, %p401
      %p403 = scmp.ne.s32.totalorder %s392, %s395
      %p404 = scmp.eq.s32.totalorder %s41, 3
      %p405 = por %p403, %p404
      %p406 = scmp.ne.s32.totalorder %s395, %s396
      %p407 = scmp.eq.s32.totalorder %s41, 0
      %p408 = por %p406, %p407
      %p409 = scmp.ne.s32.totalorder %s395, %s396
      %p410 = scmp.eq.s32.totalorder %s42, 3
      %p411 = por %p409, %p410
      %p413 = scmp.ne.s32.totalorder %s396, %s412
      %p414 = scmp.eq.s32.totalorder %s42, 0
      %p415 = por %p413, %p414
      %p416 = scmp.le.s32.totalorder 1, %s36
      %p417 = scmp.lt.s32.totalorder %s36, 5
      %p418 = pnand %p416, %p417
      %p419 = pneg %p418
      // Predicated region
      $region9: #{tpu_custom_call.1} parent=5 // pred_check
        _
      $region10: #{tpu_custom_call.1} parent=5 // pred_check_branch
        %421 = sbr.rel (%p418) target = $region12
      $region11: #{tpu_custom_call.1} parent=5 // pred_region
        %s422 = ssub.s32 %s36, 1
        // Predicated region
        $region13: #{tpu_custom_call.1} parent=11 // pred_check
          %p423 = pneg %p149
        $region14: #{tpu_custom_call.1} parent=11 // pred_check_branch
          %425 = sbr.rel (%p423) target = $region16
        $region15: #{tpu_custom_call.1} parent=11 // pred_region
          %s427 = ssub.s32 128, 128
          %428 = vsyncadd [#allocation9], %s427
          %s429 = sshll.u32 [#allocation8], 4
          %s430 = int_to_ptr.vmem [resolvable:$true] %s429
          %435 = dma.hbm_to_vmem [thread:$0]  %s3, 128, %s430, [#allocation9], 64, 64, 4
        $region16: #{tpu_custom_call.1} parent=11 // pred_fallthru
          _
        // Predicated region
        $region17: #{tpu_custom_call.1} parent=11 // pred_check
          %p436 = pneg %p170
        $region18: #{tpu_custom_call.1} parent=11 // pred_check_branch
          %438 = sbr.rel (%p436) target = $region20
        $region19: #{tpu_custom_call.1} parent=11 // pred_region
          %s440 = ssub.s32 256, 256
          %441 = vsyncadd [#allocation9], %s440
          %s442 = sshll.u32 [#allocation10], 4
          %s443 = int_to_ptr.vmem [resolvable:$true] %s442
          %448 = dma.hbm_to_vmem [thread:$0]  %s4, 256, %s443, [#allocation9], 128, 128, 8
        $region20: #{tpu_custom_call.1} parent=11 // pred_fallthru
          _
        // Predicated region
        $region21: #{tpu_custom_call.1} parent=11 // pred_check
          %p449 = pneg %p191
        $region22: #{tpu_custom_call.1} parent=11 // pred_check_branch
          %451 = sbr.rel (%p449) target = $region24
        $region23: #{tpu_custom_call.1} parent=11 // pred_region
          %s453 = ssub.s32 128, 128
          %454 = vsyncadd [#allocation12], %s453
          %s455 = sshll.u32 [#allocation11], 4
          %s456 = int_to_ptr.vmem [resolvable:$true] %s455
          %461 = dma.hbm_to_vmem [thread:$0]  %s5, 128, %s456, [#allocation12], 64, 64, 4
        $region24: #{tpu_custom_call.1} parent=11 // pred_fallthru
          _
        // Predicated region
        $region25: #{tpu_custom_call.1} parent=11 // pred_check
          %p462 = pneg %p212
        $region26: #{tpu_custom_call.1} parent=11 // pred_check_branch
          %464 = sbr.rel (%p462) target = $region28
        $region27: #{tpu_custom_call.1} parent=11 // pred_region
          %s466 = ssub.s32 256, 256
          %467 = vsyncadd [#allocation12], %s466
          %s468 = sshll.u32 [#allocation13], 4
          %s469 = int_to_ptr.vmem [resolvable:$true] %s468
          %474 = dma.hbm_to_vmem [thread:$0]  %s6, 256, %s469, [#allocation12], 128, 128, 8
        $region28: #{tpu_custom_call.1} parent=11 // pred_fallthru
          _
        // Predicated region
        $region29: #{tpu_custom_call.1} parent=11 // pred_check
          %p475 = pneg %p233
        $region30: #{tpu_custom_call.1} parent=11 // pred_check_branch
          %477 = sbr.rel (%p475) target = $region32
        $region31: #{tpu_custom_call.1} parent=11 // pred_region
          %s479 = ssub.s32 128, 128
          %480 = vsyncadd [#allocation15], %s479
          %s481 = sshll.u32 [#allocation14], 4
          %s482 = int_to_ptr.vmem [resolvable:$true] %s481
          %487 = dma.hbm_to_vmem [thread:$0]  %s7, 128, %s482, [#allocation15], 64, 64, 4
        $region32: #{tpu_custom_call.1} parent=11 // pred_fallthru
          _
        // Predicated region
        $region33: #{tpu_custom_call.1} parent=11 // pred_check
          %p488 = pneg %p254
        $region34: #{tpu_custom_call.1} parent=11 // pred_check_branch
          %490 = sbr.rel (%p488) target = $region36
        $region35: #{tpu_custom_call.1} parent=11 // pred_region
          %s492 = ssub.s32 16, 16
          %493 = vsyncadd [#allocation15], %s492
          %s495 = sshll.u32 [#allocation16], 4
          %s496 = int_to_ptr.vmem [resolvable:$true] %s495
          %498 = dma.hbm_to_vmem [thread:$0]  %s8, 16, %s496, [#allocation15]
        $region36: #{tpu_custom_call.1} parent=11 // pred_fallthru
          _
        // Predicated region
        $region37: #{tpu_custom_call.1} parent=11 // pred_check
          %p499 = pneg %p275
        $region38: #{tpu_custom_call.1} parent=11 // pred_check_branch
          %501 = sbr.rel (%p499) target = $region40
        $region39: #{tpu_custom_call.1} parent=11 // pred_region
          %s503 = ssub.s32 128, 128
          %504 = vsyncadd [#allocation18], %s503
          %s505 = sshll.u32 [#allocation17], 4
          %s506 = int_to_ptr.vmem [resolvable:$true] %s505
          %511 = dma.hbm_to_vmem [thread:$0]  %s9, 128, %s506, [#allocation18], 64, 64, 4
        $region40: #{tpu_custom_call.1} parent=11 // pred_fallthru
          _
        // Predicated region
        $region41: #{tpu_custom_call.1} parent=11 // pred_check
          %p512 = pneg %p296
        $region42: #{tpu_custom_call.1} parent=11 // pred_check_branch
          %514 = sbr.rel (%p512) target = $region44
        $region43: #{tpu_custom_call.1} parent=11 // pred_region
          %s516 = ssub.s32 16, 16
          %517 = vsyncadd [#allocation18], %s516
          %s519 = sshll.u32 [#allocation19], 4
          %s520 = int_to_ptr.vmem [resolvable:$true] %s519
          %522 = dma.hbm_to_vmem [thread:$0]  %s10, 16, %s520, [#allocation18]
        $region44: #{tpu_custom_call.1} parent=11 // pred_fallthru
          _
        // Predicated region
        $region45: #{tpu_custom_call.1} parent=11 // pred_check
          %p523 = pneg %p317
        $region46: #{tpu_custom_call.1} parent=11 // pred_check_branch
          %525 = sbr.rel (%p523) target = $region48
        $region47: #{tpu_custom_call.1} parent=11 // pred_region
          %s527 = ssub.s32 128, 128
          %528 = vsyncadd [#allocation21], %s527
          %s529 = sshll.u32 [#allocation20], 4
          %s530 = int_to_ptr.vmem [resolvable:$true] %s529
          %535 = dma.hbm_to_vmem [thread:$0]  %s11, 128, %s530, [#allocation21], 64, 64, 4
        $region48: #{tpu_custom_call.1} parent=11 // pred_fallthru
          _
        // Predicated region
        $region49: #{tpu_custom_call.1} parent=11 // pred_check
          %p536 = pneg %p338
        $region50: #{tpu_custom_call.1} parent=11 // pred_check_branch
          %538 = sbr.rel (%p536) target = $region52
        $region51: #{tpu_custom_call.1} parent=11 // pred_region
          %s540 = ssub.s32 256, 256
          %541 = vsyncadd [#allocation21], %s540
          %s542 = sshll.u32 [#allocation22], 4
          %s543 = int_to_ptr.vmem [resolvable:$true] %s542
          %548 = dma.hbm_to_vmem [thread:$0]  %s12, 256, %s543, [#allocation21], 128, 128, 8
        $region52: #{tpu_custom_call.1} parent=11 // pred_fallthru
          _
        // Predicated region
        $region53: #{tpu_custom_call.1} parent=11 // pred_check
          %p549 = pneg %p359
        $region54: #{tpu_custom_call.1} parent=11 // pred_check_branch
          %551 = sbr.rel (%p549) target = $region56
        $region55: #{tpu_custom_call.1} parent=11 // pred_region
          %s553 = ssub.s32 128, 128
          %554 = vsyncadd [#allocation24], %s553
          %s555 = sshll.u32 [#allocation23], 4
          %s556 = int_to_ptr.vmem [resolvable:$true] %s555
          %561 = dma.hbm_to_vmem [thread:$0]  %s13, 128, %s556, [#allocation24], 64, 64, 4
        $region56: #{tpu_custom_call.1} parent=11 // pred_fallthru
          _
        // Predicated region
        $region57: #{tpu_custom_call.1} parent=11 // pred_check
          %p562 = pneg %p380
        $region58: #{tpu_custom_call.1} parent=11 // pred_check_branch
          %564 = sbr.rel (%p562) target = $region60
        $region59: #{tpu_custom_call.1} parent=11 // pred_region
          %s566 = ssub.s32 256, 256
          %567 = vsyncadd [#allocation24], %s566
          %s568 = sshll.u32 [#allocation25], 4
          %s569 = int_to_ptr.vmem [resolvable:$true] %s568
          %574 = dma.hbm_to_vmem [thread:$0]  %s14, 256, %s569, [#allocation24], 128, 128, 8
        $region60: #{tpu_custom_call.1} parent=11 // pred_fallthru
          _
      $region12: #{tpu_custom_call.1} parent=5 // pred_fallthru
        _
      %p575 = scmp.lt.s32.totalorder %s36, 4
      // Predicated region
      $region61: #{tpu_custom_call.1} parent=5 // pred_check
        %p576 = pneg %p575
      $region62: #{tpu_custom_call.1} parent=5 // pred_check_branch
        %578 = sbr.rel (%p576) target = $region64
      $region63: #{tpu_custom_call.1} parent=5 // pred_region
        // Predicated region
        $region65: #{tpu_custom_call.1} parent=63 // pred_check
          %p579 = pneg %p70
        $region66: #{tpu_custom_call.1} parent=63 // pred_check_branch
          %581 = sbr.rel (%p579) target = $region68
        $region67: #{tpu_custom_call.1} parent=63 // pred_region
          %s582 = sand.u32 %s60, 1
          %s583 = scalar_lea.sflag [#allocation3], %s582
          %s584 = sand.u32 %s60, 1
          %s585 = smul.addr %s584, 8
          %s586 = scalar_lea.vmem [#allocation2], %s585
          %s588 = ssub.s32 128, 128
          %589 = vsyncadd %s583, %s588
          %s590 = smul.addr %s43, 4
          %s591 = sadd.s32 %s44, %s590
          %s592 = smul.addr %s591, 64
          %s593 = scalar_lea.hbm %s0, %s592
          %s594 = sshll.u32 %s586, 4
          %s595 = int_to_ptr.vmem [resolvable:$true] %s594
          %600 = dma.hbm_to_vmem [thread:$0]  %s593, 128, %s595, %s583, 128, 64, 4
        $region68: #{tpu_custom_call.1} parent=63 // pred_fallthru
          _
        // Predicated region
        $region69: #{tpu_custom_call.1} parent=63 // pred_check
          %p601 = pneg %p96
        $region70: #{tpu_custom_call.1} parent=63 // pred_check_branch
          %603 = sbr.rel (%p601) target = $region72
        $region71: #{tpu_custom_call.1} parent=63 // pred_region
          %s604 = sand.u32 %s36, 1
          %s605 = scalar_lea.sflag [#allocation6], %s604
          %s606 = sand.u32 %s86, 1
          %s607 = smul.addr %s606, 8
          %s608 = scalar_lea.vmem [#allocation5], %s607
          %s610 = ssub.s32 128, 128
          %611 = vsyncadd %s605, %s610
          %s612 = smul.addr %s43, 2
          %s613 = smul.addr %s612, 64
          %s614 = scalar_lea.hbm %s1, %s613
          %s615 = sshll.u32 %s608, 4
          %s616 = int_to_ptr.vmem [resolvable:$true] %s615
          %621 = dma.hbm_to_vmem [thread:$0]  %s614, 128, %s616, %s605, 64, 64, 4
        $region72: #{tpu_custom_call.1} parent=63 // pred_fallthru
          _
        // Predicated region
        $region73: #{tpu_custom_call.1} parent=63 // pred_check
          %p622 = pneg %p122
        $region74: #{tpu_custom_call.1} parent=63 // pred_check_branch
          %624 = sbr.rel (%p622) target = $region76
        $region75: #{tpu_custom_call.1} parent=63 // pred_region
          %s625 = sand.u32 %s36, 1
          %s626 = scalar_lea.sflag [#allocation6], %s625
          %s627 = sand.u32 %s112, 1
          %s628 = smul.addr %s627, 8
          %s629 = scalar_lea.vmem [#allocation7], %s628
          %s631 = ssub.s32 128, 128
          %632 = vsyncadd %s626, %s631
          %s633 = smul.addr %s43, 2
          %s634 = smul.addr %s633, 64
          %s635 = scalar_lea.hbm %s2, %s634
          %s636 = sshll.u32 %s629, 4
          %s637 = int_to_ptr.vmem [resolvable:$true] %s636
          %642 = dma.hbm_to_vmem [thread:$0]  %s635, 128, %s637, %s626, 64, 64, 4
        $region76: #{tpu_custom_call.1} parent=63 // pred_fallthru
          _
      $region64: #{tpu_custom_call.1} parent=5 // pred_fallthru
        _
      %p643 = scmp.le.s32.totalorder 1, %s36
      %p644 = scmp.lt.s32.totalorder %s36, 5
      %p645 = pnand %p643, %p644
      %p646 = pneg %p645
      // Predicated region
      $region77: #{tpu_custom_call.1} parent=5 // pred_check
        _
      $region78: #{tpu_custom_call.1} parent=5 // pred_check_branch
        %648 = sbr.rel (%p645) target = $region80
      $region79: #{tpu_custom_call.1} parent=5 // pred_region
        %s649 = ssub.s32 %s36, 1
        %s650 = sand.u32 %s63, 1
        %s651 = scalar_lea.sflag [#allocation3], %s650
        %s652 = sand.u32 %s63, 1
        %s653 = smul.addr %s652, 8
        %s654 = scalar_lea.vmem [#allocation2], %s653
        // Predicated region
        $region81: #{tpu_custom_call.1} parent=79 // pred_check
          %p655 = pneg %p76
        $region82: #{tpu_custom_call.1} parent=79 // pred_check_branch
          %657 = sbr.rel (%p655) target = $region84
        $region83: #{tpu_custom_call.1} parent=79 // pred_region
          %658 = dma.done %s651, 128
        $region84: #{tpu_custom_call.1} parent=79 // pred_fallthru
          _
        %s659 = sand.u32 %s41, 1
        %s660 = scalar_lea.sflag [#allocation6], %s659
        %s661 = sand.u32 %s89, 1
        %s662 = smul.addr %s661, 8
        %s663 = scalar_lea.vmem [#allocation5], %s662
        // Predicated region
        $region85: #{tpu_custom_call.1} parent=79 // pred_check
          %p664 = pneg %p102
        $region86: #{tpu_custom_call.1} parent=79 // pred_check_branch
          %666 = sbr.rel (%p664) target = $region88
        $region87: #{tpu_custom_call.1} parent=79 // pred_region
          %667 = dma.done %s660, 128
        $region88: #{tpu_custom_call.1} parent=79 // pred_fallthru
          _
        %s668 = sand.u32 %s41, 1
        %s669 = scalar_lea.sflag [#allocation6], %s668
        %s670 = sand.u32 %s115, 1
        %s671 = smul.addr %s670, 8
        %s672 = scalar_lea.vmem [#allocation7], %s671
        // Predicated region
        $region89: #{tpu_custom_call.1} parent=79 // pred_check
          %p673 = pneg %p128
        $region90: #{tpu_custom_call.1} parent=79 // pred_check_branch
          %675 = sbr.rel (%p673) target = $region92
        $region91: #{tpu_custom_call.1} parent=79 // pred_region
          %676 = dma.done %s669, 128
        $region92: #{tpu_custom_call.1} parent=79 // pred_fallthru
          _
        // Predicated region
        $region93: #{tpu_custom_call.1} parent=79 // pred_check
          %p677 = pneg %p149
        $region94: #{tpu_custom_call.1} parent=79 // pred_check_branch
          %679 = sbr.rel (%p677) target = $region96
        $region95: #{tpu_custom_call.1} parent=79 // pred_region
          %680 = dma.done [#allocation9], 128
        $region96: #{tpu_custom_call.1} parent=79 // pred_fallthru
          _
        // Predicated region
        $region97: #{tpu_custom_call.1} parent=79 // pred_check
          %p681 = pneg %p170
        $region98: #{tpu_custom_call.1} parent=79 // pred_check_branch
          %683 = sbr.rel (%p681) target = $region100
        $region99: #{tpu_custom_call.1} parent=79 // pred_region
          %684 = dma.done [#allocation9], 256
        $region100: #{tpu_custom_call.1} parent=79 // pred_fallthru
          _
        // Predicated region
        $region101: #{tpu_custom_call.1} parent=79 // pred_check
          %p685 = pneg %p191
        $region102: #{tpu_custom_call.1} parent=79 // pred_check_branch
          %687 = sbr.rel (%p685) target = $region104
        $region103: #{tpu_custom_call.1} parent=79 // pred_region
          %688 = dma.done [#allocation12], 128
        $region104: #{tpu_custom_call.1} parent=79 // pred_fallthru
          _
        // Predicated region
        $region105: #{tpu_custom_call.1} parent=79 // pred_check
          %p689 = pneg %p212
        $region106: #{tpu_custom_call.1} parent=79 // pred_check_branch
          %691 = sbr.rel (%p689) target = $region108
        $region107: #{tpu_custom_call.1} parent=79 // pred_region
          %692 = dma.done [#allocation12], 256
        $region108: #{tpu_custom_call.1} parent=79 // pred_fallthru
          _
        // Predicated region
        $region109: #{tpu_custom_call.1} parent=79 // pred_check
          %p693 = pneg %p233
        $region110: #{tpu_custom_call.1} parent=79 // pred_check_branch
          %695 = sbr.rel (%p693) target = $region112
        $region111: #{tpu_custom_call.1} parent=79 // pred_region
          %696 = dma.done [#allocation15], 128
        $region112: #{tpu_custom_call.1} parent=79 // pred_fallthru
          _
        // Predicated region
        $region113: #{tpu_custom_call.1} parent=79 // pred_check
          %p697 = pneg %p254
        $region114: #{tpu_custom_call.1} parent=79 // pred_check_branch
          %699 = sbr.rel (%p697) target = $region116
        $region115: #{tpu_custom_call.1} parent=79 // pred_region
          %700 = dma.done [#allocation15], 16
        $region116: #{tpu_custom_call.1} parent=79 // pred_fallthru
          _
        // Predicated region
        $region117: #{tpu_custom_call.1} parent=79 // pred_check
          %p701 = pneg %p275
        $region118: #{tpu_custom_call.1} parent=79 // pred_check_branch
          %703 = sbr.rel (%p701) target = $region120
        $region119: #{tpu_custom_call.1} parent=79 // pred_region
          %704 = dma.done [#allocation18], 128
        $region120: #{tpu_custom_call.1} parent=79 // pred_fallthru
          _
        // Predicated region
        $region121: #{tpu_custom_call.1} parent=79 // pred_check
          %p705 = pneg %p296
        $region122: #{tpu_custom_call.1} parent=79 // pred_check_branch
          %707 = sbr.rel (%p705) target = $region124
        $region123: #{tpu_custom_call.1} parent=79 // pred_region
          %708 = dma.done [#allocation18], 16
        $region124: #{tpu_custom_call.1} parent=79 // pred_fallthru
          _
        // Predicated region
        $region125: #{tpu_custom_call.1} parent=79 // pred_check
          %p709 = pneg %p317
        $region126: #{tpu_custom_call.1} parent=79 // pred_check_branch
          %711 = sbr.rel (%p709) target = $region128
        $region127: #{tpu_custom_call.1} parent=79 // pred_region
          %712 = dma.done [#allocation21], 128
        $region128: #{tpu_custom_call.1} parent=79 // pred_fallthru
          _
        // Predicated region
        $region129: #{tpu_custom_call.1} parent=79 // pred_check
          %p713 = pneg %p338
        $region130: #{tpu_custom_call.1} parent=79 // pred_check_branch
          %715 = sbr.rel (%p713) target = $region132
        $region131: #{tpu_custom_call.1} parent=79 // pred_region
          %716 = dma.done [#allocation21], 256
        $region132: #{tpu_custom_call.1} parent=79 // pred_fallthru
          _
        // Predicated region
        $region133: #{tpu_custom_call.1} parent=79 // pred_check
          %p717 = pneg %p359
        $region134: #{tpu_custom_call.1} parent=79 // pred_check_branch
          %719 = sbr.rel (%p717) target = $region136
        $region135: #{tpu_custom_call.1} parent=79 // pred_region
          %720 = dma.done [#allocation24], 128
        $region136: #{tpu_custom_call.1} parent=79 // pred_fallthru
          _
        // Predicated region
        $region137: #{tpu_custom_call.1} parent=79 // pred_check
          %p721 = pneg %p380
        $region138: #{tpu_custom_call.1} parent=79 // pred_check_branch
          %723 = sbr.rel (%p721) target = $region140
        $region139: #{tpu_custom_call.1} parent=79 // pred_region
          %724 = dma.done [#allocation24], 256
        $region140: #{tpu_custom_call.1} parent=79 // pred_fallthru
          _
        %s725 = sand.u32 %s63, 1
        %s726 = scalar_lea.sflag [#allocation3], %s725
        %s727 = sand.u32 %s63, 1
        %s728 = smul.addr %s727, 8
        %s729 = scalar_lea.vmem [#allocation2], %s728
        %p730 = pneg %p76
        %p731 = pneg %p73
        %s732 = sand.u32 %s41, 1
        %s733 = scalar_lea.sflag [#allocation6], %s732
        %s734 = sand.u32 %s89, 1
        %s735 = smul.addr %s734, 8
        %s736 = scalar_lea.vmem [#allocation5], %s735
        %p737 = pneg %p102
        %p738 = pneg %p99
        %s739 = sand.u32 %s41, 1
        %s740 = scalar_lea.sflag [#allocation6], %s739
        %s741 = sand.u32 %s115, 1
        %s742 = smul.addr %s741, 8
        %s743 = scalar_lea.vmem [#allocation7], %s742
        %p744 = pneg %p128
        %p745 = pneg %p125
        %p746 = pneg %p149
        %p747 = pneg %p146
        %p748 = pneg %p170
        %p749 = pneg %p167
        %p750 = pneg %p191
        %p751 = pneg %p188
        %p752 = pneg %p212
        %p753 = pneg %p209
        %p754 = pneg %p233
        %p755 = pneg %p230
        %p756 = pneg %p254
        %p757 = pneg %p251
        %p758 = pneg %p275
        %p759 = pneg %p272
        %p760 = pneg %p296
        %p761 = pneg %p293
        %p762 = pneg %p317
        %p763 = pneg %p314
        %p764 = pneg %p338
        %p765 = pneg %p335
        %p766 = pneg %p359
        %p767 = pneg %p356
        %p768 = pneg %p380
        %p769 = pneg %p377
        %p770 = pneg %p408
        %p771 = pneg %p405
        %s772 = sand.u32 %s395, 1
        %s773 = scalar_lea.sflag [#allocation4], %s772
        %s774 = sand.u32 %s395, 1
        %s775 = smul.addr %s774, 8
        %s776 = scalar_lea.vmem [#allocation26], %s775
        %v778 = vld [vmem:[%s654] sm:$0xf]
        %v779 = vld [vmem:[%s654 + $0x4] sm:$0xf]
        %v780 = vld [vmem:[%s663] sm:$0xf]
        %v781 = vld [vmem:[%s663 + $0x4] sm:$0xf]
        %v782 = vld [vmem:[%s672] sm:$0xf]
        %v783 = vld [vmem:[%s672 + $0x4] sm:$0xf]
        %v784 = vld [vmem:[#allocation8] sm:$0xf]
        %v785 = vld [vmem:[#allocation8 + $0x4] sm:$0xf]
        %v786 = vld [vmem:[#allocation10] sm:$0xff]
        %v787 = vld [vmem:[#allocation10 + $0x8] sm:$0xff]
        %789 = vset.pattern.permute.xlu0 0
        %790 = vperm.xlu0 %789, %v786
        %v791 = vpop.permute.xlu0 %790
        %794 = vset.pattern.permute.xlu0 0
        %795 = vperm.xlu0 %794, %v787
        %v796 = vpop.permute.xlu0 %795
        %v800 = vunpack.c.l.b16 %v784
        %v801 = vunpack.c.l.b16 %v785
        %v802 = vpack.c.b16 %v801, %v800
        %v805 = vunpack.c.l.b16 %v778
        %v806 = vunpack.c.l.b16 %v779
        %v807 = vpack.c.b16 %v806, %v805
        %vm809 = vcmask 130048
        %v811 = vsel %vm809, %v802, 0
        %813 = vmatprep.subr.bf16.mxu0 0
        %814 = vmatpush1.bf16.msra.mxu0 %v807
        %815 = vmatprep.subr.bf16.mxu0 0
        %816 = vmatpush1.bf16.msra.mxu0 0
        %817 = vmatprep.subr.bf16.mxu0 0
        %818 = vmatpush1.bf16.msra.mxu0 0
        %819 = vmatprep.subr.bf16.mxu0 0
        %820 = vmatpush1.bf16.msra.mxu0 0
        %821 = vmatprep.subr.bf16.mxu0 0
        %822 = vmatpush1.bf16.msra.mxu0 0
        %823 = vmatprep.subr.bf16.mxu0 0
        %824 = vmatpush1.bf16.msra.mxu0 0
        %825 = vmatprep.subr.bf16.mxu0 0
        %826 = vmatpush1.bf16.msra.mxu0 0
        %827 = vmatprep.subr.bf16.mxu0 0
        %828 = vmatpush1.bf16.msra.mxu0 0
        %829 = vmatprep.subr.bf16.mxu0 0
        %830 = vmatpush1.bf16.msra.mxu0 0
        %831 = vmatprep.subr.bf16.mxu0 0
        %832 = vmatpush1.bf16.msra.mxu0 0
        %833 = vmatprep.subr.bf16.mxu0 0
        %834 = vmatpush1.bf16.msra.mxu0 0
        %835 = vmatprep.subr.bf16.mxu0 0
        %836 = vmatpush1.bf16.msra.mxu0 0
        %837 = vmatprep.subr.bf16.mxu0 0
        %838 = vmatpush1.bf16.msra.mxu0 0
        %839 = vmatprep.subr.bf16.mxu0 0
        %840 = vmatpush1.bf16.msra.mxu0 0
        %841 = vmatprep.subr.bf16.mxu0 0
        %842 = vmatpush1.bf16.msra.mxu0 0
        %843 = vmatprep.subr.bf16.mxu0 0
        %844 = vmatpush1.bf16.msra.mxu0 0
        %845 = vmatprep.mubr.bf16.mxu0 0
        %846 = vmatmul.mubr.bf16.gmra.mrb[0].mxu0 %v811
        %v847 = vpop.f32.mrb[0].mxu0
        %v848 = vadd.f32 %v791, %v847
        %v849 = vpop.f32.mrb[0].mxu0
        %v850 = vpop.f32.mrb[0].mxu0
        %v851 = vadd.f32 %v796, %v850
        %v852 = vpop.f32.mrb[0].mxu0
        %853 = vdwg.mxu0
        %v854 = vmax.f32 %v848, 0.0
        %v855 = vmax.f32 %v851, 0.0
        %v856 = vld [vmem:[#allocation11] sm:$0xf]
        %v857 = vld [vmem:[#allocation11 + $0x4] sm:$0xf]
        %v858 = vpack.c.bf16 %v855, %v854
        %v859 = vld [vmem:[#allocation13] sm:$0xff]
        %v860 = vld [vmem:[#allocation13 + $0x8] sm:$0xff]
        %862 = vset.pattern.permute.xlu0 0
        %863 = vperm.xlu0 %862, %v859
        %v864 = vpop.permute.xlu0 %863
        %867 = vset.pattern.permute.xlu0 0
        %868 = vperm.xlu0 %867, %v860
        %v869 = vpop.permute.xlu0 %868
        %v873 = vunpack.c.l.b16 %v856
        %v874 = vunpack.c.l.b16 %v857
        %v875 = vpack.c.b16 %v874, %v873
        %v877 = vsel %vm809, %v875, 0
        %879 = vmatprep.subr.bf16.mxu0 0
        %880 = vmatpush1.bf16.msra.mxu0 %v858
        %881 = vmatprep.subr.bf16.mxu0 0
        %882 = vmatpush1.bf16.msra.mxu0 0
        %883 = vmatprep.subr.bf16.mxu0 0
        %884 = vmatpush1.bf16.msra.mxu0 0
        %885 = vmatprep.subr.bf16.mxu0 0
        %886 = vmatpush1.bf16.msra.mxu0 0
        %887 = vmatprep.subr.bf16.mxu0 0
        %888 = vmatpush1.bf16.msra.mxu0 0
        %889 = vmatprep.subr.bf16.mxu0 0
        %890 = vmatpush1.bf16.msra.mxu0 0
        %891 = vmatprep.subr.bf16.mxu0 0
        %892 = vmatpush1.bf16.msra.mxu0 0
        %893 = vmatprep.subr.bf16.mxu0 0
        %894 = vmatpush1.bf16.msra.mxu0 0
        %895 = vmatprep.subr.bf16.mxu0 0
        %896 = vmatpush1.bf16.msra.mxu0 0
        %897 = vmatprep.subr.bf16.mxu0 0
        %898 = vmatpush1.bf16.msra.mxu0 0
        %899 = vmatprep.subr.bf16.mxu0 0
        %900 = vmatpush1.bf16.msra.mxu0 0
        %901 = vmatprep.subr.bf16.mxu0 0
        %902 = vmatpush1.bf16.msra.mxu0 0
        %903 = vmatprep.subr.bf16.mxu0 0
        %904 = vmatpush1.bf16.msra.mxu0 0
        %905 = vmatprep.subr.bf16.mxu0 0
        %906 = vmatpush1.bf16.msra.mxu0 0
        %907 = vmatprep.subr.bf16.mxu0 0
        %908 = vmatpush1.bf16.msra.mxu0 0
        %909 = vmatprep.subr.bf16.mxu0 0
        %910 = vmatpush1.bf16.msra.mxu0 0
        %911 = vmatprep.mubr.bf16.mxu0 0
        %912 = vmatmul.mubr.bf16.gmra.mrb[0].mxu0 %v877
        %v913 = vpop.f32.mrb[0].mxu0
        %v914 = vadd.f32 %v864, %v913
        %v915 = vpop.f32.mrb[0].mxu0
        %v916 = vpop.f32.mrb[0].mxu0
        %v917 = vadd.f32 %v869, %v916
        %v918 = vpop.f32.mrb[0].mxu0
        %919 = vdwg.mxu0
        %v920 = vmax.f32 %v914, 0.0
        %v921 = vmax.f32 %v917, 0.0
        %v922 = vld [vmem:[#allocation14] sm:$0xf]
        %v923 = vld [vmem:[#allocation14 + $0x4] sm:$0xf]
        %v924 = vld [vmem:[#allocation16] sm:$0x1]
        %v926 = vlaneseq
        %v927 = vshrl.u32 %v926, 7
        %v928 = vsub.s32 0, %v927
        %v929 = vrot.slane %v924, %v928
        %v933 = vunpack.c.l.b16 %v780
        %v934 = vunpack.c.l.b16 %v781
        %v935 = vpack.c.b16 %v934, %v933
        %v938 = vunpack.c.l.b16 %v922
        %v939 = vunpack.c.l.b16 %v923
        %v940 = vpack.c.b16 %v939, %v938
        %v943 = vsel %vm809, %v935, 0
        %945 = vmatprep.subr.bf16.mxu0 0
        %946 = vmatpush1.bf16.msra.mxu0 %v940
        %947 = vmatprep.subr.bf16.mxu0 0
        %948 = vmatpush1.bf16.msra.mxu0 0
        %949 = vmatprep.subr.bf16.mxu0 0
        %950 = vmatpush1.bf16.msra.mxu0 0
        %951 = vmatprep.subr.bf16.mxu0 0
        %952 = vmatpush1.bf16.msra.mxu0 0
        %953 = vmatprep.subr.bf16.mxu0 0
        %954 = vmatpush1.bf16.msra.mxu0 0
        %955 = vmatprep.subr.bf16.mxu0 0
        %956 = vmatpush1.bf16.msra.mxu0 0
        %957 = vmatprep.subr.bf16.mxu0 0
        %958 = vmatpush1.bf16.msra.mxu0 0
        %959 = vmatprep.subr.bf16.mxu0 0
        %960 = vmatpush1.bf16.msra.mxu0 0
        %961 = vmatprep.subr.bf16.mxu0 0
        %962 = vmatpush1.bf16.msra.mxu0 0
        %963 = vmatprep.subr.bf16.mxu0 0
        %964 = vmatpush1.bf16.msra.mxu0 0
        %965 = vmatprep.subr.bf16.mxu0 0
        %966 = vmatpush1.bf16.msra.mxu0 0
        %967 = vmatprep.subr.bf16.mxu0 0
        %968 = vmatpush1.bf16.msra.mxu0 0
        %969 = vmatprep.subr.bf16.mxu0 0
        %970 = vmatpush1.bf16.msra.mxu0 0
        %971 = vmatprep.subr.bf16.mxu0 0
        %972 = vmatpush1.bf16.msra.mxu0 0
        %973 = vmatprep.subr.bf16.mxu0 0
        %974 = vmatpush1.bf16.msra.mxu0 0
        %975 = vmatprep.subr.bf16.mxu0 0
        %976 = vmatpush1.bf16.msra.mxu0 0
        %977 = vmatprep.mubr.bf16.mxu0 0
        %978 = vmatmul.mubr.bf16.gmra.mrb[0].mxu0 %v943
        %v979 = vpop.f32.mrb[0].mxu0
        %v980 = vadd.f32 %v929, %v979
        %v981 = vpop.f32.mrb[0].mxu0
        %v982 = vpop.f32.mrb[0].mxu0
        %v983 = vadd.f32 %v929, %v982
        %v984 = vpop.f32.mrb[0].mxu0
        %985 = vdwg.mxu0
        %v986 = vmax.f32 %v980, 0.0
        %v987 = vmax.f32 %v983, 0.0
        %v988 = vpack.c.bf16 %v987, %v986
        %v989 = vld [vmem:[#allocation17] sm:$0xf]
        %v990 = vld [vmem:[#allocation17 + $0x4] sm:$0xf]
        %v991 = vld [vmem:[#allocation19] sm:$0x1]
        %v993 = vlaneseq
        %v994 = vshrl.u32 %v993, 7
        %v995 = vsub.s32 0, %v994
        %v996 = vrot.slane %v991, %v995
        %v1000 = vunpack.c.l.b16 %v989
        %v1001 = vunpack.c.l.b16 %v990
        %v1002 = vpack.c.b16 %v1001, %v1000
        %v1005 = vsel %vm809, %v988, 0
        %1007 = vmatprep.subr.bf16.mxu0 0
        %1008 = vmatpush1.bf16.msra.mxu0 %v1002
        %1009 = vmatprep.subr.bf16.mxu0 0
        %1010 = vmatpush1.bf16.msra.mxu0 0
        %1011 = vmatprep.subr.bf16.mxu0 0
        %1012 = vmatpush1.bf16.msra.mxu0 0
        %1013 = vmatprep.subr.bf16.mxu0 0
        %1014 = vmatpush1.bf16.msra.mxu0 0
        %1015 = vmatprep.subr.bf16.mxu0 0
        %1016 = vmatpush1.bf16.msra.mxu0 0
        %1017 = vmatprep.subr.bf16.mxu0 0
        %1018 = vmatpush1.bf16.msra.mxu0 0
        %1019 = vmatprep.subr.bf16.mxu0 0
        %1020 = vmatpush1.bf16.msra.mxu0 0
        %1021 = vmatprep.subr.bf16.mxu0 0
        %1022 = vmatpush1.bf16.msra.mxu0 0
        %1023 = vmatprep.subr.bf16.mxu0 0
        %1024 = vmatpush1.bf16.msra.mxu0 0
        %1025 = vmatprep.subr.bf16.mxu0 0
        %1026 = vmatpush1.bf16.msra.mxu0 0
        %1027 = vmatprep.subr.bf16.mxu0 0
        %1028 = vmatpush1.bf16.msra.mxu0 0
        %1029 = vmatprep.subr.bf16.mxu0 0
        %1030 = vmatpush1.bf16.msra.mxu0 0
        %1031 = vmatprep.subr.bf16.mxu0 0
        %1032 = vmatpush1.bf16.msra.mxu0 0
        %1033 = vmatprep.subr.bf16.mxu0 0
        %1034 = vmatpush1.bf16.msra.mxu0 0
        %1035 = vmatprep.subr.bf16.mxu0 0
        %1036 = vmatpush1.bf16.msra.mxu0 0
        %1037 = vmatprep.subr.bf16.mxu0 0
        %1038 = vmatpush1.bf16.msra.mxu0 0
        %1039 = vmatprep.mubr.bf16.mxu0 0
        %1040 = vmatmul.mubr.bf16.gmra.mrb[0].mxu0 %v1005
        %v1041 = vpop.f32.mrb[0].mxu0
        %v1042 = vadd.f32 %v996, %v1041
        %v1043 = vpop.f32.mrb[0].mxu0
        %v1044 = vpop.f32.mrb[0].mxu0
        %v1045 = vadd.f32 %v996, %v1044
        %v1046 = vpop.f32.mrb[0].mxu0
        %1047 = vdwg.mxu0
        %v1048 = vmax.f32 %v1042, 0.0
        %v1049 = vmax.f32 %v1045, 0.0
        %v1050 = vld [vmem:[#allocation20] sm:$0xf]
        %v1051 = vld [vmem:[#allocation20 + $0x4] sm:$0xf]
        %v1052 = vld [vmem:[#allocation22] sm:$0xff]
        %v1053 = vld [vmem:[#allocation22 + $0x8] sm:$0xff]
        %1055 = vset.pattern.permute.xlu0 0
        %1056 = vperm.xlu0 %1055, %v1052
        %v1057 = vpop.permute.xlu0 %1056
        %1060 = vset.pattern.permute.xlu0 0
        %1061 = vperm.xlu0 %1060, %v1053
        %v1062 = vpop.permute.xlu0 %1061
        %v1066 = vunpack.c.l.b16 %v1050
        %v1067 = vunpack.c.l.b16 %v1051
        %v1068 = vpack.c.b16 %v1067, %v1066
        %v1071 = vunpack.c.l.b16 %v782
        %v1072 = vunpack.c.l.b16 %v783
        %v1073 = vpack.c.b16 %v1072, %v1071
        %v1076 = vsel %vm809, %v1068, 0
        %1078 = vmatprep.subr.bf16.mxu0 0
        %1079 = vmatpush1.bf16.msra.mxu0 %v1073
        %1080 = vmatprep.subr.bf16.mxu0 0
        %1081 = vmatpush1.bf16.msra.mxu0 0
        %1082 = vmatprep.subr.bf16.mxu0 0
        %1083 = vmatpush1.bf16.msra.mxu0 0
        %1084 = vmatprep.subr.bf16.mxu0 0
        %1085 = vmatpush1.bf16.msra.mxu0 0
        %1086 = vmatprep.subr.bf16.mxu0 0
        %1087 = vmatpush1.bf16.msra.mxu0 0
        %1088 = vmatprep.subr.bf16.mxu0 0
        %1089 = vmatpush1.bf16.msra.mxu0 0
        %1090 = vmatprep.subr.bf16.mxu0 0
        %1091 = vmatpush1.bf16.msra.mxu0 0
        %1092 = vmatprep.subr.bf16.mxu0 0
        %1093 = vmatpush1.bf16.msra.mxu0 0
        %1094 = vmatprep.subr.bf16.mxu0 0
        %1095 = vmatpush1.bf16.msra.mxu0 0
        %1096 = vmatprep.subr.bf16.mxu0 0
        %1097 = vmatpush1.bf16.msra.mxu0 0
        %1098 = vmatprep.subr.bf16.mxu0 0
        %1099 = vmatpush1.bf16.msra.mxu0 0
        %1100 = vmatprep.subr.bf16.mxu0 0
        %1101 = vmatpush1.bf16.msra.mxu0 0
        %1102 = vmatprep.subr.bf16.mxu0 0
        %1103 = vmatpush1.bf16.msra.mxu0 0
        %1104 = vmatprep.subr.bf16.mxu0 0
        %1105 = vmatpush1.bf16.msra.mxu0 0
        %1106 = vmatprep.subr.bf16.mxu0 0
        %1107 = vmatpush1.bf16.msra.mxu0 0
        %1108 = vmatprep.subr.bf16.mxu0 0
        %1109 = vmatpush1.bf16.msra.mxu0 0
        %1110 = vmatprep.mubr.bf16.mxu0 0
        %1111 = vmatmul.mubr.bf16.gmra.mrb[0].mxu0 %v1076
        %v1112 = vpop.f32.mrb[0].mxu0
        %v1113 = vadd.f32 %v1057, %v1112
        %v1114 = vpop.f32.mrb[0].mxu0
        %v1115 = vpop.f32.mrb[0].mxu0
        %v1116 = vadd.f32 %v1062, %v1115
        %v1117 = vpop.f32.mrb[0].mxu0
        %1118 = vdwg.mxu0
        %v1119 = vmax.f32 %v1113, 0.0
        %v1120 = vmax.f32 %v1116, 0.0
        %v1121 = vpack.c.bf16 %v1049, %v1048
        %v1122 = vpack.c.bf16 %v921, %v920
        %v1124 = vsel %vm809, %v1121, 0
        %1126 = vmatprep.subr.bf16.mxu0 0
        %1127 = vmatpush1.bf16.msra.mxu0 %v1122
        %1128 = vmatprep.subr.bf16.mxu0 0
        %1129 = vmatpush1.bf16.msra.mxu0 0
        %1130 = vmatprep.subr.bf16.mxu0 0
        %1131 = vmatpush1.bf16.msra.mxu0 0
        %1132 = vmatprep.subr.bf16.mxu0 0
        %1133 = vmatpush1.bf16.msra.mxu0 0
        %1134 = vmatprep.subr.bf16.mxu0 0
        %1135 = vmatpush1.bf16.msra.mxu0 0
        %1136 = vmatprep.subr.bf16.mxu0 0
        %1137 = vmatpush1.bf16.msra.mxu0 0
        %1138 = vmatprep.subr.bf16.mxu0 0
        %1139 = vmatpush1.bf16.msra.mxu0 0
        %1140 = vmatprep.subr.bf16.mxu0 0
        %1141 = vmatpush1.bf16.msra.mxu0 0
        %1142 = vmatprep.subr.bf16.mxu0 0
        %1143 = vmatpush1.bf16.msra.mxu0 0
        %1144 = vmatprep.subr.bf16.mxu0 0
        %1145 = vmatpush1.bf16.msra.mxu0 0
        %1146 = vmatprep.subr.bf16.mxu0 0
        %1147 = vmatpush1.bf16.msra.mxu0 0
        %1148 = vmatprep.subr.bf16.mxu0 0
        %1149 = vmatpush1.bf16.msra.mxu0 0
        %1150 = vmatprep.subr.bf16.mxu0 0
        %1151 = vmatpush1.bf16.msra.mxu0 0
        %1152 = vmatprep.subr.bf16.mxu0 0
        %1153 = vmatpush1.bf16.msra.mxu0 0
        %1154 = vmatprep.subr.bf16.mxu0 0
        %1155 = vmatpush1.bf16.msra.mxu0 0
        %1156 = vmatprep.subr.bf16.mxu0 0
        %1157 = vmatpush1.bf16.msra.mxu0 0
        %1158 = vmatprep.mubr.bf16.mxu0 0
        %1159 = vmatmul.mubr.bf16.gmra.mrb[0].mxu0 %v1124
        %v1160 = vpop.f32.mrb[0].mxu0
        %v1161 = vadd.f32 0.0, %v1160
        %v1162 = vpop.f32.mrb[0].mxu0
        %v1163 = vpop.f32.mrb[0].mxu0
        %v1164 = vadd.f32 0.0, %v1163
        %v1165 = vpop.f32.mrb[0].mxu0
        %1166 = vdwg.mxu0
        %v1167 = vlaneseq
        %v1168 = vshrl.u32 %v1167, 7
        %v1169 = vadd.s32 %v1168, 8
        %vm1170 = vcmp.lt.s32.totalorder %v1168, 8
        %vm1171 = vcmp.lt.s32.totalorder %v1169, 8
        %v1172 = vsel %vm1170, %v1161, -1e+30
        %v1173 = vsel %vm1171, %v1164, -1e+30
        %v1174 = vmax.f32 %v1172, %v1173
        %v1175 = vrot.slane %v1174, 4
        %v1176 = vmax.f32 %v1174, %v1175
        %v1177 = vrot.slane %v1176, 2
        %v1178 = vmax.f32 %v1176, %v1177
        %v1179 = vrot.slane %v1178, 1
        %v1180 = vmax.f32 %v1178, %v1179
        %v1181 = vsub.f32 %v1172, %v1180
        %v1182 = vsub.f32 %v1173, %v1180
        %v1183 = vmul.f32 %v1181, 1.442695
        %v1184 = vpow.pop %v1183
        %v1185 = vmul.f32 %v1182, 1.442695
        %v1186 = vpow.pop %v1185
        %v1187 = vadd.f32 %v1184, %v1186
        %v1188 = vrot.slane %v1187, 4
        %v1189 = vadd.f32 %v1187, %v1188
        %v1190 = vrot.slane %v1189, 2
        %v1191 = vadd.f32 %v1189, %v1190
        %v1192 = vrot.slane %v1191, 1
        %v1193 = vadd.f32 %v1191, %v1192
        %v1194 = vrcp.pop %v1193
        %v1195 = vmul.f32 %v1184, %v1194
        %v1196 = vmul.f32 %v1186, %v1194
        %v1197 = vpack.c.bf16 %v1120, %v1119
        %v1198 = vpack.c.bf16 %v1196, %v1195
        %v1200 = vsel %vm809, %v1197, 0
        %1202 = vmatprep.subr.bf16.mxu0 0
        %1203 = vmatpush1.bf16.msra.mxu0 %v1198
        %1204 = vmatprep.subr.bf16.mxu0 0
        %1205 = vmatpush1.bf16.msra.mxu0 0
        %1206 = vmatprep.subr.bf16.mxu0 0
        %1207 = vmatpush1.bf16.msra.mxu0 0
        %1208 = vmatprep.subr.bf16.mxu0 0
        %1209 = vmatpush1.bf16.msra.mxu0 0
        %1210 = vmatprep.subr.bf16.mxu0 0
        %1211 = vmatpush1.bf16.msra.mxu0 0
        %1212 = vmatprep.subr.bf16.mxu0 0
        %1213 = vmatpush1.bf16.msra.mxu0 0
        %1214 = vmatprep.subr.bf16.mxu0 0
        %1215 = vmatpush1.bf16.msra.mxu0 0
        %1216 = vmatprep.subr.bf16.mxu0 0
        %1217 = vmatpush1.bf16.msra.mxu0 0
        %1218 = vmatprep.subr.bf16.mxu0 0
        %1219 = vmatpush1.bf16.msra.mxu0 0
        %1220 = vmatprep.subr.bf16.mxu0 0
        %1221 = vmatpush1.bf16.msra.mxu0 0
        %1222 = vmatprep.subr.bf16.mxu0 0
        %1223 = vmatpush1.bf16.msra.mxu0 0
        %1224 = vmatprep.subr.bf16.mxu0 0
        %1225 = vmatpush1.bf16.msra.mxu0 0
        %1226 = vmatprep.subr.bf16.mxu0 0
        %1227 = vmatpush1.bf16.msra.mxu0 0
        %1228 = vmatprep.subr.bf16.mxu0 0
        %1229 = vmatpush1.bf16.msra.mxu0 0
        %1230 = vmatprep.subr.bf16.mxu0 0
        %1231 = vmatpush1.bf16.msra.mxu0 0
        %1232 = vmatprep.subr.bf16.mxu0 0
        %1233 = vmatpush1.bf16.msra.mxu0 0
        %1234 = vmatprep.mubr.bf16.mxu0 0
        %1235 = vmatmul.mubr.bf16.gmra.mrb[0].mxu0 %v1200
        %v1236 = vpop.f32.mrb[0].mxu0
        %v1237 = vadd.f32 0.0, %v1236
        %v1238 = vpop.f32.mrb[0].mxu0
        %v1239 = vpop.f32.mrb[0].mxu0
        %v1240 = vadd.f32 0.0, %v1239
        %v1241 = vpop.f32.mrb[0].mxu0
        %1242 = vdwg.mxu0
        %v1243 = vld [vmem:[#allocation23] sm:$0xf]
        %v1244 = vld [vmem:[#allocation23 + $0x4] sm:$0xf]
        %v1245 = vpack.c.bf16 %v1240, %v1237
        %v1246 = vld [vmem:[#allocation25] sm:$0xff]
        %v1247 = vld [vmem:[#allocation25 + $0x8] sm:$0xff]
        %1249 = vset.pattern.permute.xlu0 0
        %1250 = vperm.xlu0 %1249, %v1246
        %v1251 = vpop.permute.xlu0 %1250
        %1254 = vset.pattern.permute.xlu0 0
        %1255 = vperm.xlu0 %1254, %v1247
        %v1256 = vpop.permute.xlu0 %1255
        %v1260 = vunpack.c.l.b16 %v1243
        %v1261 = vunpack.c.l.b16 %v1244
        %v1262 = vpack.c.b16 %v1261, %v1260
        %v1264 = vsel %vm809, %v1262, 0
        %1266 = vmatprep.subr.bf16.mxu0 0
        %1267 = vmatpush1.bf16.msra.mxu0 %v1245
        %1268 = vmatprep.subr.bf16.mxu0 0
        %1269 = vmatpush1.bf16.msra.mxu0 0
        %1270 = vmatprep.subr.bf16.mxu0 0
        %1271 = vmatpush1.bf16.msra.mxu0 0
        %1272 = vmatprep.subr.bf16.mxu0 0
        %1273 = vmatpush1.bf16.msra.mxu0 0
        %1274 = vmatprep.subr.bf16.mxu0 0
        %1275 = vmatpush1.bf16.msra.mxu0 0
        %1276 = vmatprep.subr.bf16.mxu0 0
        %1277 = vmatpush1.bf16.msra.mxu0 0
        %1278 = vmatprep.subr.bf16.mxu0 0
        %1279 = vmatpush1.bf16.msra.mxu0 0
        %1280 = vmatprep.subr.bf16.mxu0 0
        %1281 = vmatpush1.bf16.msra.mxu0 0
        %1282 = vmatprep.subr.bf16.mxu0 0
        %1283 = vmatpush1.bf16.msra.mxu0 0
        %1284 = vmatprep.subr.bf16.mxu0 0
        %1285 = vmatpush1.bf16.msra.mxu0 0
        %1286 = vmatprep.subr.bf16.mxu0 0
        %1287 = vmatpush1.bf16.msra.mxu0 0
        %1288 = vmatprep.subr.bf16.mxu0 0
        %1289 = vmatpush1.bf16.msra.mxu0 0
        %1290 = vmatprep.subr.bf16.mxu0 0
        %1291 = vmatpush1.bf16.msra.mxu0 0
        %1292 = vmatprep.subr.bf16.mxu0 0
        %1293 = vmatpush1.bf16.msra.mxu0 0
        %1294 = vmatprep.subr.bf16.mxu0 0
        %1295 = vmatpush1.bf16.msra.mxu0 0
        %1296 = vmatprep.subr.bf16.mxu0 0
        %1297 = vmatpush1.bf16.msra.mxu0 0
        %1298 = vmatprep.mubr.bf16.mxu0 0
        %1299 = vmatmul.mubr.bf16.gmra.mrb[0].mxu0 %v1264
        %v1300 = vpop.f32.mrb[0].mxu0
        %v1301 = vadd.f32 %v1251, %v1300
        %v1302 = vpop.f32.mrb[0].mxu0
        %v1303 = vpop.f32.mrb[0].mxu0
        %v1304 = vadd.f32 %v1256, %v1303
        %v1305 = vpop.f32.mrb[0].mxu0
        %1306 = vdwg.mxu0
        %v1307 = vmax.f32 %v1301, 0.0
        %v1308 = vmax.f32 %v1304, 0.0
        %v1309 = vpack.c.bf16 %v1308, %v1307
        %v1311 = vunpack.c.l.b16 %v1309
        %v1312 = vunpack.c.h.b16 %v1309
        %v1313 = vpack.c.b16 %v1311, %v1311
        %v1314 = vpack.c.b16 %v1312, %v1312
        %1317 = vst [vmem:[%s776] sm:$0xf] %v1313
        %1318 = vst [vmem:[%s776 + $0x4] sm:$0xf] %v1314
        %s1319 = sand.u32 %s395, 1
        %s1320 = scalar_lea.sflag [#allocation4], %s1319
        %s1321 = sand.u32 %s395, 1
        %s1322 = smul.addr %s1321, 8
        %s1323 = scalar_lea.vmem [#allocation26], %s1322
        // Predicated region
        $region141: #{tpu_custom_call.1} parent=79 // pred_check
          %p1324 = pneg %p405
        $region142: #{tpu_custom_call.1} parent=79 // pred_check_branch
          %1326 = sbr.rel (%p1324) target = $region144
        $region143: #{tpu_custom_call.1} parent=79 // pred_region
          %s1328 = ssub.s32 128, 128
          %1329 = vsyncadd %s1320, %s1328
          %s1330 = smul.addr %s45, 4
          %s1331 = sadd.s32 %s46, %s1330
          %s1332 = smul.addr %s1331, 64
          %s1333 = scalar_lea.hbm %s15, %s1332
          %s1334 = sshll.u32 %s1323, 4
          %s1335 = int_to_ptr.vmem [resolvable:$true] %s1334
          %1340 = dma.vmem_to_hbm [thread:$0]  %s1335, 128, %s1333, %s1320, 64, 128, 4
        $region144: #{tpu_custom_call.1} parent=79 // pred_fallthru
          _
      $region80: #{tpu_custom_call.1} parent=5 // pred_fallthru
        _
      %p1341 = scmp.le.s32.totalorder 2, %s36
      // Predicated region
      $region145: #{tpu_custom_call.1} parent=5 // pred_check
        %p1342 = pneg %p1341
      $region146: #{tpu_custom_call.1} parent=5 // pred_check_branch
        %1344 = sbr.rel (%p1342) target = $region148
      $region147: #{tpu_custom_call.1} parent=5 // pred_region
        %s1345 = ssub.s32 %s36, 2
        // Predicated region
        $region149: #{tpu_custom_call.1} parent=147 // pred_check
          %p1346 = pneg %p411
        $region150: #{tpu_custom_call.1} parent=147 // pred_check_branch
          %1348 = sbr.rel (%p1346) target = $region152
        $region151: #{tpu_custom_call.1} parent=147 // pred_region
          %s1349 = sand.u32 %s396, 1
          %s1350 = scalar_lea.sflag [#allocation4], %s1349
          %s1351 = sand.u32 %s396, 1
          %s1352 = smul.addr %s1351, 8
          %s1353 = scalar_lea.vmem [#allocation26], %s1352
          %1354 = dma.done %s1350, 128
        $region152: #{tpu_custom_call.1} parent=147 // pred_fallthru
          _
      $region148: #{tpu_custom_call.1} parent=5 // pred_fallthru
        _
    $region6: #{tpu_custom_call.1} parent=1 // loop_footer
      %s40 = sadd.s32 1, %s36
    $region7: #{tpu_custom_call.1} parent=1 // loop_footer_branch
      %35 = sbr.rel target = $region3
    $region8: #{tpu_custom_call.1} parent=1 // loop_exit
      _
    %1355 = vsyncpa [#allocation3], 1
    %s1356 = scalar_lea.sflag [#allocation3], 1
    %1357 = vsyncpa %s1356, 1
    %1358 = vsyncpa [#allocation6], 1
    %s1359 = scalar_lea.sflag [#allocation6], 1
    %1360 = vsyncpa %s1359, 1
    %1361 = vsyncpa [#allocation9], 1
    %1362 = vsyncpa [#allocation12], 1
    %1363 = vsyncpa [#allocation15], 1
    %1364 = vsyncpa [#allocation18], 1
    %1365 = vsyncpa [#allocation21], 1
    %1366 = vsyncpa [#allocation24], 1
    %1367 = vsyncpa [#allocation4], 1
    %s1368 = scalar_lea.sflag [#allocation4], 1
    %1369 = vsyncpa %s1368, 1

</llo_original>
